<compile_context>
chip_gen: v5e
topology: v5e:2x2
jax: 0.10.0
libtpu: 0.0.40
codegen_flags: <defaults>
</compile_context>

<pallas_src>
import jax
import jax.numpy as jnp
from jax.experimental import pallas as pl
from jax.experimental.pallas import tpu as pltpu

LANE = 128   # lane width (last-dim padding target)
SUB = 8      # sublane width (graph-count padding target)


# ---------------------------------------------------------------------------
# helpers
# ---------------------------------------------------------------------------
def round_up(v, m):
    return (v + m - 1) // m * m


def pad2(a, rows, cols):
    return jnp.pad(a, ((0, rows - a.shape[0]), (0, cols - a.shape[1])))


def _softsign(v):
    return v / (1.0 + jnp.abs(v))


def _full_spec(arr):
    # whole (small) 2-D array resident in VMEM; constant block index -> one DMA
    return pl.BlockSpec(arr.shape, lambda i: (0, 0))


# ---------------------------------------------------------------------------
# fused GlobalAttention kernel
# ---------------------------------------------------------------------------
def make_global_attention_kernel(n_real, tm):
    def kernel(x_ref, seg_ref,
               wg1_ref, bg1_ref, wg2_ref, bg2_ref, wn_ref, bn_ref,
               out_ref, m_acc, l_acc):
        i = pl.program_id(0)

        @pl.when(i == 0)
        def _init():
            m_acc[...] = jnp.full_like(m_acc, -1e30)
            l_acc[...] = jnp.zeros_like(l_acc)
            out_ref[...] = jnp.zeros_like(out_ref)

        xt = x_ref[...]                                           # [tm, Fin_p]

        # gate_nn: Linear -> Softsign -> Linear          (logits: [tm, Fout_p])
        hg = _softsign(jnp.dot(xt, wg1_ref[...],
                               preferred_element_type=jnp.float32)
                       + bg1_ref[...])
        logits = jnp.dot(hg, wg2_ref[...],
                         preferred_element_type=jnp.float32) + bg2_ref[...]

        # nn: Linear -> Softsign                         (feat:   [tm, Fout_p])
        feat = _softsign(jnp.dot(xt, wn_ref[...],
                                 preferred_element_type=jnp.float32)
                         + bn_ref[...])

        # mask padded node rows out of the softmax statistics
        row = jax.lax.broadcasted_iota(jnp.int32, logits.shape, 0) + i * tm
        logits = jnp.where(row < n_real, logits, -1e30)

        # online segment softmax: shared running column max, per-graph sums.
        # (the shift cancels exactly in the final ratio, so this matches the
        #  per-segment-max reference softmax)
        m_new = jnp.maximum(m_acc[...], jnp.max(logits, axis=0, keepdims=True))
        alpha = jnp.exp(m_acc[...] - m_new)                       # [1, Fout_p]
        e = jnp.exp(logits - m_new)                               # [tm, Fout_p]

        seg = seg_ref[...]                                        # [Gp, tm] bf16 0/1
        l_acc[...] = alpha * l_acc[...] + jnp.dot(
            seg, e.astype(jnp.bfloat16), preferred_element_type=jnp.float32)
        out_ref[...] = alpha * out_ref[...] + jnp.dot(
            seg, (e * feat).astype(jnp.bfloat16),
            preferred_element_type=jnp.float32)
        m_acc[...] = m_new

        @pl.when(i == pl.num_programs(0) - 1)
        def _finalize():
            l = l_acc[...]
            l_safe = jnp.where(l > 0.0, l, 1.0)      # padded graph rows
            out_ref[...] = out_ref[...] * pl.reciprocal(l_safe, approx=True)

    return kernel


# ---------------------------------------------------------------------------
# wrapper: padding, segment matrix, pallas_call
# ---------------------------------------------------------------------------
def global_attention_forward(x, batch, params, num_graphs, *, tm=LANE):
    """GlobalAttention.forward(x, batch, size=num_graphs)."""
    assert tm % LANE == 0
    n, f_in = x.shape
    f_hid = params["wg1"].shape[1]
    f_gate = params["wg2"].shape[1]
    f_out = params["wn"].shape[1]
    # elementwise gating (gate width == feature width), as used in SG_CNN.
    # (gate_nn with output width 1 would broadcast; not needed here)
    assert f_gate == f_out

    n_pad = round_up(n, tm)
    fin_p = round_up(f_in, LANE)
    fh_p = round_up(f_hid, LANE)
    fo_p = round_up(f_out, LANE)
    g_pad = round_up(num_graphs, SUB)

    # lane-padded node features (f32)
    x_p = pad2(x.astype(jnp.float32), n_pad, fin_p)

    # one-hot segment (pooling) matrix [Gp, Npad]; 0/1 -> exact in bf16
    seg = (batch[None, :] == jnp.arange(num_graphs, dtype=batch.dtype)[:, None])
    seg = pad2(seg.astype(jnp.float32), g_pad, n_pad).astype(jnp.bfloat16)

    # zero-padded weights (resident in VMEM)
    wg1 = pad2(params["wg1"], fin_p, fh_p); bg1 = pad2(params["bg1"], 1, fh_p)
    wg2 = pad2(params["wg2"], fh_p, fo_p); bg2 = pad2(params["bg2"], 1, fo_p)
    wn = pad2(params["wn"], fin_p, fo_p);  bn = pad2(params["bn"], 1, fo_p)

    grid = (n_pad // tm,)
    out = pl.pallas_call(
        make_global_attention_kernel(n, tm),
        grid=grid,
        in_specs=[
            pl.BlockSpec((tm, fin_p), lambda i: (i, 0)),     # node tile
            pl.BlockSpec((g_pad, tm), lambda i: (0, i)),     # segment columns
            _full_spec(wg1), _full_spec(bg1),
            _full_spec(wg2), _full_spec(bg2),
            _full_spec(wn), _full_spec(bn),
        ],
        out_specs=pl.BlockSpec((g_pad, fo_p), lambda i: (0, 0)),
        out_shape=jax.ShapeDtypeStruct((g_pad, fo_p), jnp.float32),
        scratch_shapes=[pltpu.VMEM((1, fo_p), jnp.float32),       # running max
                        pltpu.VMEM((g_pad, fo_p), jnp.float32)],  # per-graph Z
        compiler_params=pltpu.CompilerParams(
            dimension_semantics=("arbitrary",)),   # reduction over node tiles
    )(x_p, seg, wg1, bg1, wg2, bg2, wn, bn)
    return out[:num_graphs, :f_out]


# ---------------------------------------------------------------------------
# pure-JAX reference (PyG-style segment softmax + scatter-add)
# ---------------------------------------------------------------------------
def global_attention_ref(x, batch, params, num_graphs):
    hg = _softsign(x @ params["wg1"] + params["bg1"])
    logits = hg @ params["wg2"] + params["bg2"]
    feat = _softsign(x @ params["wn"] + params["bn"])
    seg_max = jax.ops.segment_max(logits, batch, num_segments=num_graphs)
    e = jnp.exp(logits - seg_max[batch])
    denom = jax.ops.segment_sum(e, batch, num_segments=num_graphs)
    gate = e / denom[batch]
    return jax.ops.segment_sum(gate * feat, batch, num_segments=num_graphs)


# TODO(synk): `size = batch[-1].item() + 1` (host sync) is replaced by a static
# num_graphs argument; the nn=None pass-through branch is not exercised here.

if __name__ == "__main__":
    key = jax.random.PRNGKey(0)
    N = 250                      # nodes (last tile partially padded)
    F_IN, F_HID, F_OUT = 32, 64, 64
    SIZES = (100, 90, 60)        # 3 graphs
    G = len(SIZES)

    kx, k1, k2, k3, k4, k5, k6 = jax.random.split(key, 7)
    w = lambda k, s: 0.2 * jax.random.uniform(k, s, jnp.float32, -1.0, 1.0)

    x = jax.random.normal(kx, (N, F_IN), jnp.float32)
    batch = jnp.concatenate(
        [jnp.full((s,), g, jnp.int32) for g, s in enumerate(SIZES)])

    params = dict(wg1=w(k1, (F_IN, F_HID)), bg1=w(k2, (1, F_HID)),
                  wg2=w(k3, (F_HID, F_OUT)), bg2=w(k4, (1, F_OUT)),
                  wn=w(k5, (F_IN, F_OUT)), bn=w(k6, (1, F_OUT)))

    out = jax.block_until_ready(
        global_attention_forward(x, batch, params, num_graphs=G, tm=128))
    ref = global_attention_ref(x, batch, params, G)

    assert out.shape == (G, F_OUT)
    assert bool(jnp.all(jnp.isfinite(out)))
    assert bool(jnp.allclose(out, ref, rtol=2e-2, atol=2e-2))
    print("KERNEL_OK")
</pallas_src>

<mosaic_0001>
module attributes {stable_mosaic.version = 11 : i64} {
  func.func @kernel(%arg0: i32, %arg1: memref<128x128xf32, #tpu.memory_space<vmem>>, %arg2: memref<8x128xbf16, #tpu.memory_space<vmem>>, %arg3: memref<128x128xf32, #tpu.memory_space<vmem>>, %arg4: memref<1x128xf32, #tpu.memory_space<vmem>>, %arg5: memref<128x128xf32, #tpu.memory_space<vmem>>, %arg6: memref<1x128xf32, #tpu.memory_space<vmem>>, %arg7: memref<128x128xf32, #tpu.memory_space<vmem>>, %arg8: memref<1x128xf32, #tpu.memory_space<vmem>>, %arg9: memref<8x128xf32, #tpu.memory_space<vmem>>, %arg10: memref<1x128xf32, #tpu.memory_space<vmem>>, %arg11: memref<8x128xf32, #tpu.memory_space<vmem>>) attributes {dimension_semantics = [#tpu.dimension_semantics<arbitrary>], iteration_bounds = array<i64: 2>, scalar_prefetch = 0 : i64, scratch_operands = 2 : i64, tpu.core_type = #tpu.core_type<tc>, window_params = [{transform_indices = @transform_0, window_bounds = array<i64: 128, 128>}, {transform_indices = @transform_1, window_bounds = array<i64: 8, 128>}, {pipeline_mode = #tpu.pipeline_mode<synchronous>, transform_indices = @transform_2, window_bounds = array<i64: 128, 128>}, {pipeline_mode = #tpu.pipeline_mode<synchronous>, transform_indices = @transform_3, window_bounds = array<i64: 1, 128>}, {pipeline_mode = #tpu.pipeline_mode<synchronous>, transform_indices = @transform_4, window_bounds = array<i64: 128, 128>}, {pipeline_mode = #tpu.pipeline_mode<synchronous>, transform_indices = @transform_5, window_bounds = array<i64: 1, 128>}, {pipeline_mode = #tpu.pipeline_mode<synchronous>, transform_indices = @transform_6, window_bounds = array<i64: 128, 128>}, {pipeline_mode = #tpu.pipeline_mode<synchronous>, transform_indices = @transform_7, window_bounds = array<i64: 1, 128>}, {pipeline_mode = #tpu.pipeline_mode<synchronous>, transform_indices = @transform_8, window_bounds = array<i64: 8, 128>}]} {
    %c0_i32 = arith.constant 0 : i32
    %0 = arith.cmpi eq, %arg0, %c0_i32 : i32
    %1 = arith.extui %0 : i1 to i32
    %c0_i32_0 = arith.constant 0 : i32
    %2 = arith.cmpi ne, %1, %c0_i32_0 : i32
    scf.if %2 {
      %cst_39 = arith.constant -1.000000e+30 : f32
      %65 = vector.broadcast %cst_39 : f32 to vector<1x128xf32>
      %c0_40 = arith.constant 0 : index
      %c0_41 = arith.constant 0 : index
      %66 = vector.load %arg10[%c0_40, %c0_41] : memref<1x128xf32, #tpu.memory_space<vmem>>, vector<1x128xf32>
      tpu.vector_store %arg10[%c0_40, %c0_41], %65 {strides = array<i32>} : memref<1x128xf32, #tpu.memory_space<vmem>>, vector<1x128xf32>,
      %cst_42 = arith.constant 0.000000e+00 : f32
      %67 = vector.broadcast %cst_42 : f32 to vector<8x128xf32>
      %c0_43 = arith.constant 0 : index
      %c0_44 = arith.constant 0 : index
      %68 = vector.load %arg11[%c0_43, %c0_44] : memref<8x128xf32, #tpu.memory_space<vmem>>, vector<8x128xf32>
      tpu.vector_store %arg11[%c0_43, %c0_44], %67 {strides = array<i32>} : memref<8x128xf32, #tpu.memory_space<vmem>>, vector<8x128xf32>,
      %cst_45 = arith.constant 0.000000e+00 : f32
      %69 = vector.broadcast %cst_45 : f32 to vector<8x128xf32>
      %c0_46 = arith.constant 0 : index
      %c0_47 = arith.constant 0 : index
      %70 = vector.load %arg9[%c0_46, %c0_47] : memref<8x128xf32, #tpu.memory_space<vmem>>, vector<8x128xf32>
      tpu.vector_store %arg9[%c0_46, %c0_47], %69 {strides = array<i32>} : memref<8x128xf32, #tpu.memory_space<vmem>>, vector<8x128xf32>,
    } else {
    }
    %c0 = arith.constant 0 : index
    %c0_1 = arith.constant 0 : index
    %3 = vector.load %arg1[%c0, %c0_1] : memref<128x128xf32, #tpu.memory_space<vmem>>, vector<128x128xf32>
    %c0_2 = arith.constant 0 : index
    %c0_3 = arith.constant 0 : index
    %4 = vector.load %arg3[%c0_2, %c0_3] : memref<128x128xf32, #tpu.memory_space<vmem>>, vector<128x128xf32>
    %cst = arith.constant dense<0.000000e+00> : vector<128x128xf32>
    %5 = tpu.matmul %3, %4, %cst {dimension_numbers = #tpu.dot_dimension_numbers<[1], [0], [0], [1], [0, 0, 1, 1], [], []>} : vector<128x128xf32>, vector<128x128xf32>, vector<128x128xf32> -> vector<128x128xf32>
    %c0_4 = arith.constant 0 : index
    %c0_5 = arith.constant 0 : index
    %6 = vector.load %arg4[%c0_4, %c0_5] : memref<1x128xf32, #tpu.memory_space<vmem>>, vector<1x128xf32>
    %7 = vector.broadcast %6 : vector<1x128xf32> to vector<128x128xf32>
    %8 = arith.addf %5, %7 : vector<128x128xf32>
    %9 = math.absf %8 : vector<128x128xf32>
    %cst_6 = arith.constant 1.000000e+00 : f32
    %10 = vector.broadcast %cst_6 : f32 to vector<128x128xf32>
    %11 = arith.addf %10, %9 : vector<128x128xf32>
    %12 = arith.divf %8, %11 : vector<128x128xf32>
    %c0_7 = arith.constant 0 : index
    %c0_8 = arith.constant 0 : index
    %13 = vector.load %arg5[%c0_7, %c0_8] : memref<128x128xf32, #tpu.memory_space<vmem>>, vector<128x128xf32>
    %cst_9 = arith.constant dense<0.000000e+00> : vector<128x128xf32>
    %14 = tpu.matmul %12, %13, %cst_9 {dimension_numbers = #tpu.dot_dimension_numbers<[1], [0], [0], [1], [0, 0, 1, 1], [], []>} : vector<128x128xf32>, vector<128x128xf32>, vector<128x128xf32> -> vector<128x128xf32>
    %c0_10 = arith.constant 0 : index
    %c0_11 = arith.constant 0 : index
    %15 = vector.load %arg6[%c0_10, %c0_11] : memref<1x128xf32, #tpu.memory_space<vmem>>, vector<1x128xf32>
    %16 = vector.broadcast %15 : vector<1x128xf32> to vector<128x128xf32>
    %17 = arith.addf %14, %16 : vector<128x128xf32>
    %c0_12 = arith.constant 0 : index
    %c0_13 = arith.constant 0 : index
    %18 = vector.load %arg7[%c0_12, %c0_13] : memref<128x128xf32, #tpu.memory_space<vmem>>, vector<128x128xf32>
    %cst_14 = arith.constant dense<0.000000e+00> : vector<128x128xf32>
    %19 = tpu.matmul %3, %18, %cst_14 {dimension_numbers = #tpu.dot_dimension_numbers<[1], [0], [0], [1], [0, 0, 1, 1], [], []>} : vector<128x128xf32>, vector<128x128xf32>, vector<128x128xf32> -> vector<128x128xf32>
    %c0_15 = arith.constant 0 : index
    %c0_16 = arith.constant 0 : index
    %20 = vector.load %arg8[%c0_15, %c0_16] : memref<1x128xf32, #tpu.memory_space<vmem>>, vector<1x128xf32>
    %21 = vector.broadcast %20 : vector<1x128xf32> to vector<128x128xf32>
    %22 = arith.addf %19, %21 : vector<128x128xf32>
    %23 = math.absf %22 : vector<128x128xf32>
    %cst_17 = arith.constant 1.000000e+00 : f32
    %24 = vector.broadcast %cst_17 : f32 to vector<128x128xf32>
    %25 = arith.addf %24, %23 : vector<128x128xf32>
    %26 = arith.divf %22, %25 : vector<128x128xf32>
    %27 = tpu.iota {dimensions = array<i32: 0>} : vector<128x128xi32>
    %c128_i32 = arith.constant 128 : i32
    %28 = arith.muli %arg0, %c128_i32 : i32
    %29 = vector.broadcast %28 : i32 to vector<128x128xi32>
    %30 = arith.addi %27, %29 : vector<128x128xi32>
    %c250_i32 = arith.constant 250 : i32
    %31 = vector.broadcast %c250_i32 : i32 to vector<128x128xi32>
    %32 = arith.cmpi slt, %30, %31 : vector<128x128xi32>
    %cst_18 = arith.constant -1.000000e+30 : f32
    %33 = vector.broadcast %cst_18 : f32 to vector<128x128xf32>
    %34 = arith.select %32, %17, %33 : vector<128x128xi1>, vector<128x128xf32>
    %c0_19 = arith.constant 0 : index
    %c0_20 = arith.constant 0 : index
    %35 = vector.load %arg10[%c0_19, %c0_20] : memref<1x128xf32, #tpu.memory_space<vmem>>, vector<1x128xf32>
    %cst_21 = arith.constant dense<0xFF800000> : vector<128xf32>
    %36 = vector.multi_reduction <maximumf>, %34, %cst_21 [0] : vector<128x128xf32> to vector<128xf32>
    %37 = vector.shape_cast %36 : vector<128xf32> to vector<1x128xf32>
    %38 = arith.maximumf %35, %37 : vector<1x128xf32>
    %c0_22 = arith.constant 0 : index
    %c0_23 = arith.constant 0 : index
    %39 = vector.load %arg10[%c0_22, %c0_23] : memref<1x128xf32, #tpu.memory_space<vmem>>, vector<1x128xf32>
    %40 = arith.subf %39, %38 : vector<1x128xf32>
    %41 = math.exp %40 : vector<1x128xf32>
    %42 = vector.broadcast %38 : vector<1x128xf32> to vector<128x128xf32>
    %43 = arith.subf %34, %42 : vector<128x128xf32>
    %44 = math.exp %43 : vector<128x128xf32>
    %c0_24 = arith.constant 0 : index
    %c0_25 = arith.constant 0 : index
    %45 = vector.load %arg2[%c0_24, %c0_25] : memref<8x128xbf16, #tpu.memory_space<vmem>>, vector<8x128xbf16>
    %c0_26 = arith.constant 0 : index
    %c0_27 = arith.constant 0 : index
    %46 = vector.load %arg11[%c0_26, %c0_27] : memref<8x128xf32, #tpu.memory_space<vmem>>, vector<8x128xf32>
    %47 = vector.broadcast %41 : vector<1x128xf32> to vector<8x128xf32>
    %48 = arith.mulf %47, %46 : vector<8x128xf32>
    %49 = arith.truncf %44 : vector<128x128xf32> to vector<128x128xbf16>
    %cst_28 = arith.constant dense<0.000000e+00> : vector<8x128xf32>
    %50 = tpu.matmul %45, %49, %cst_28 {dimension_numbers = #tpu.dot_dimension_numbers<[1], [0], [0], [1], [0, 0, 1, 1], [], []>} : vector<8x128xbf16>, vector<128x128xbf16>, vector<8x128xf32> -> vector<8x128xf32>
    %51 = arith.addf %48, %50 : vector<8x128xf32>
    %c0_29 = arith.constant 0 : index
    %c0_30 = arith.constant 0 : index
    %52 = vector.load %arg11[%c0_29, %c0_30] : memref<8x128xf32, #tpu.memory_space<vmem>>, vector<8x128xf32>
    tpu.vector_store %arg11[%c0_29, %c0_30], %51 {strides = array<i32>} : memref<8x128xf32, #tpu.memory_space<vmem>>, vector<8x128xf32>,
    %c0_31 = arith.constant 0 : index
    %c0_32 = arith.constant 0 : index
    %53 = vector.load %arg9[%c0_31, %c0_32] : memref<8x128xf32, #tpu.memory_space<vmem>>, vector<8x128xf32>
    %54 = vector.broadcast %41 : vector<1x128xf32> to vector<8x128xf32>
    %55 = arith.mulf %54, %53 : vector<8x128xf32>
    %56 = arith.mulf %44, %26 : vector<128x128xf32>
    %57 = arith.truncf %56 : vector<128x128xf32> to vector<128x128xbf16>
    %cst_33 = arith.constant dense<0.000000e+00> : vector<8x128xf32>
    %58 = tpu.matmul %45, %57, %cst_33 {dimension_numbers = #tpu.dot_dimension_numbers<[1], [0], [0], [1], [0, 0, 1, 1], [], []>} : vector<8x128xbf16>, vector<128x128xbf16>, vector<8x128xf32> -> vector<8x128xf32>
    %59 = arith.addf %55, %58 : vector<8x128xf32>
    %c0_34 = arith.constant 0 : index
    %c0_35 = arith.constant 0 : index
    %60 = vector.load %arg9[%c0_34, %c0_35] : memref<8x128xf32, #tpu.memory_space<vmem>>, vector<8x128xf32>
    tpu.vector_store %arg9[%c0_34, %c0_35], %59 {strides = array<i32>} : memref<8x128xf32, #tpu.memory_space<vmem>>, vector<8x128xf32>,
    %c0_36 = arith.constant 0 : index
    %c0_37 = arith.constant 0 : index
    %61 = vector.load %arg10[%c0_36, %c0_37] : memref<1x128xf32, #tpu.memory_space<vmem>>, vector<1x128xf32>
    tpu.vector_store %arg10[%c0_36, %c0_37], %38 {strides = array<i32>} : memref<1x128xf32, #tpu.memory_space<vmem>>, vector<1x128xf32>,
    %c1_i32 = arith.constant 1 : i32
    %62 = arith.cmpi eq, %arg0, %c1_i32 : i32
    %63 = arith.extui %62 : i1 to i32
    %c0_i32_38 = arith.constant 0 : i32
    %64 = arith.cmpi ne, %63, %c0_i32_38 : i32
    scf.if %64 {
      %c0_39 = arith.constant 0 : index
      %c0_40 = arith.constant 0 : index
      %65 = vector.load %arg11[%c0_39, %c0_40] : memref<8x128xf32, #tpu.memory_space<vmem>>, vector<8x128xf32>
      %cst_41 = arith.constant 0.000000e+00 : f32
      %66 = vector.broadcast %cst_41 : f32 to vector<8x128xf32>
      %67 = arith.cmpf ogt, %65, %66 : vector<8x128xf32>
      %cst_42 = arith.constant 1.000000e+00 : f32
      %68 = vector.broadcast %cst_42 : f32 to vector<8x128xf32>
      %69 = arith.select %67, %65, %68 : vector<8x128xi1>, vector<8x128xf32>
      %c0_43 = arith.constant 0 : index
      %c0_44 = arith.constant 0 : index
      %70 = vector.load %arg9[%c0_43, %c0_44] : memref<8x128xf32, #tpu.memory_space<vmem>>, vector<8x128xf32>
      %71 = tpu.reciprocal %69 {approx = true} : vector<8x128xf32> -> vector<8x128xf32>
      %72 = arith.mulf %70, %71 : vector<8x128xf32>
      %c0_45 = arith.constant 0 : index
      %c0_46 = arith.constant 0 : index
      %73 = vector.load %arg9[%c0_45, %c0_46] : memref<8x128xf32, #tpu.memory_space<vmem>>, vector<8x128xf32>
      tpu.vector_store %arg9[%c0_45, %c0_46], %72 {strides = array<i32>} : memref<8x128xf32, #tpu.memory_space<vmem>>, vector<8x128xf32>,
    } else {
    }
    return
  }
  func.func @transform_0(%arg0: i32) -> (i32, i32) {
    %c0_i32 = arith.constant 0 : i32
    %c0_i32_0 = arith.constant 0 : i32
    return %arg0, %c0_i32 : i32, i32
  }
  func.func @transform_1(%arg0: i32) -> (i32, i32) {
    %c0_i32 = arith.constant 0 : i32
    %c0_i32_0 = arith.constant 0 : i32
    return %c0_i32, %arg0 : i32, i32
  }
  func.func @transform_2(%arg0: i32) -> (i32, i32) {
    %c0_i32 = arith.constant 0 : i32
    %c0_i32_0 = arith.constant 0 : i32
    %c0_i32_1 = arith.constant 0 : i32
    return %c0_i32, %c0_i32_0 : i32, i32
  }
  func.func @transform_3(%arg0: i32) -> (i32, i32) {
    %c0_i32 = arith.constant 0 : i32
    %c0_i32_0 = arith.constant 0 : i32
    %c0_i32_1 = arith.constant 0 : i32
    return %c0_i32, %c0_i32_0 : i32, i32
  }
  func.func @transform_4(%arg0: i32) -> (i32, i32) {
    %c0_i32 = arith.constant 0 : i32
    %c0_i32_0 = arith.constant 0 : i32
    %c0_i32_1 = arith.constant 0 : i32
    return %c0_i32, %c0_i32_0 : i32, i32
  }
  func.func @transform_5(%arg0: i32) -> (i32, i32) {
    %c0_i32 = arith.constant 0 : i32
    %c0_i32_0 = arith.constant 0 : i32
    %c0_i32_1 = arith.constant 0 : i32
    return %c0_i32, %c0_i32_0 : i32, i32
  }
  func.func @transform_6(%arg0: i32) -> (i32, i32) {
    %c0_i32 = arith.constant 0 : i32
    %c0_i32_0 = arith.constant 0 : i32
    %c0_i32_1 = arith.constant 0 : i32
    return %c0_i32, %c0_i32_0 : i32, i32
  }
  func.func @transform_7(%arg0: i32) -> (i32, i32) {
    %c0_i32 = arith.constant 0 : i32
    %c0_i32_0 = arith.constant 0 : i32
    %c0_i32_1 = arith.constant 0 : i32
    return %c0_i32, %c0_i32_0 : i32, i32
  }
  func.func @transform_8(%arg0: i32) -> (i32, i32) {
    %c0_i32 = arith.constant 0 : i32
    %c0_i32_0 = arith.constant 0 : i32
    %c0_i32_1 = arith.constant 0 : i32
    return %c0_i32, %c0_i32_0 : i32, i32
  }
}

</mosaic_0001>

<llo_original>
// kernel: tpu_custom_call.1
$region0: #{tpu_custom_call.1}
  #allocation0 [shape = 'u32[]', space=smem, size = 0x4, offset = 0x4, fixed_abs, tag = 'smem constant byte address 0x4 - core index']
  #allocation1 [shape = 'u32[72,128]{1,0:T(1,128)}', space=vmem, size = 0x9000, scoped, tag = 'internal scratch']
  #allocation2 [shape = 'f32[1,128]{1,0:T(1,128)}', space=vmem, size = 0x200, scoped, tag = 'scratch operand']
  #allocation3 [shape = 'f32[8,128]{1,0:T(8,128)}', space=vmem, size = 0x1000, scoped, tag = 'scratch operand']
  %s0 = inlined_call_operand.hbm [shape: f32[256,128], index: 0, kind: input, shape index: {}]
  %s1 = inlined_call_operand.hbm [shape: bf16[8,256], index: 1, kind: input, shape index: {}]
  %s2 = inlined_call_operand.hbm [shape: f32[128,128], index: 2, kind: input, shape index: {}]
  %s3 = inlined_call_operand.vmem [shape: f32[1,128], index: 3, kind: input, shape index: {}]
  %s4 = inlined_call_operand.hbm [shape: f32[128,128], index: 4, kind: input, shape index: {}]
  %s5 = inlined_call_operand.vmem [shape: f32[1,128], index: 5, kind: input, shape index: {}]
  %s6 = inlined_call_operand.hbm [shape: f32[128,128], index: 6, kind: input, shape index: {}]
  %s7 = inlined_call_operand.vmem [shape: f32[1,128], index: 7, kind: input, shape index: {}]
  %s8 = inlined_call_operand.hbm [shape: f32[8,128], index: 8, kind: output, shape index: {}]
  %s9 = sld [smem:[#allocation0]]
  $region93: #{tpu_custom_call.1} parent=0
    _
  %s11 = ssub.s32 1, %s9
  %s12 = scalar_select 0, %s11, %s9
  $region1: #{tpu_custom_call.1} parent=0
    #allocation4 [shape = 'u8[131072]{0}', space=vmem, size = 0x20000, scoped, tag = 'input window, operand 0']
    #allocation5 [shape = 's32[2]{0}', space=sflag, size = 0x8, scoped, tag = 'scoped memory for tpu_custom_call.1']
    #allocation6 [shape = 's32[2]{0}', space=sflag, size = 0x8, scoped, tag = 'scoped memory for tpu_custom_call.1']
    #allocation7 [shape = 'u8[4096]{0}', space=vmem, size = 0x1000, scoped, tag = 'input window, operand 1']
    #allocation8 [shape = 's32[2]{0}', space=sflag, size = 0x8, scoped, tag = 'scoped memory for tpu_custom_call.1']
    #allocation9 [shape = 'u8[65536]{0}', space=vmem, size = 0x10000, scoped, tag = 'input window, operand 2, single buffered']
    #allocation10 [shape = 'u8[65536]{0}', space=vmem, size = 0x10000, scoped, tag = 'input window, operand 4, single buffered']
    #allocation11 [shape = 's32[1]{0}', space=sflag, size = 0x4, scoped, tag = 'scoped memory for tpu_custom_call.1']
    #allocation12 [shape = 'u8[65536]{0}', space=vmem, size = 0x10000, scoped, tag = 'input window, operand 6, single buffered']
    #allocation13 [shape = 'u8[4096]{0}', space=vmem, size = 0x1000, scoped, tag = 'output window, operand 0, single buffered']
    %13 = vsyncpa [#allocation5], 0
    %s14 = scalar_lea.sflag [#allocation5], 1
    %15 = vsyncpa %s14, 0
    %16 = vsyncpa [#allocation8], 0
    %s17 = scalar_lea.sflag [#allocation8], 1
    %18 = vsyncpa %s17, 0
    %19 = vsyncpa [#allocation11], 0
    %20 = vsyncpa [#allocation6], 0
    loop: start=0, step=1, limit=4
    $region2: #{tpu_custom_call.1} parent=1 // loop_pre_header
      _
    $region3: #{tpu_custom_call.1} parent=1 // loop_header
      %s22 = sphi 0, %s26
      %p23 = scmp.ge.s32.totalorder %s22, 4
      %s32 = sphi 0, %s34
      %s35 = sphi 0, %s32
      %s36 = sphi 0, %s35
      %s52 = sphi 0, %s36
      %s58 = sphi 0, %s60
      %s61 = sphi 0, %s58
      %s62 = sphi 0, %s61
      %s78 = sphi 0, %s62
      %s82 = sphi 0, %s82
      %s84 = sphi 0, %s82
      %s85 = sphi 0, %s84
      %s99 = sphi 0, %s85
      %s103 = sphi 0, %s103
      %s105 = sphi 0, %s103
      %s106 = sphi 0, %s105
      %s120 = sphi 0, %s106
      %s124 = sphi 0, %s124
      %s126 = sphi 0, %s124
      %s127 = sphi 0, %s126
      %s141 = sphi 0, %s127
      %s145 = sphi 0, %s145
      %s147 = sphi 0, %s145
      %s148 = sphi 0, %s147
      %s162 = sphi 0, %s148
      %s166 = sphi 0, %s166
      %s168 = sphi 0, %s166
      %s169 = sphi 0, %s168
      %s183 = sphi 0, %s169
      %s187 = sphi 0, %s187
      %s189 = sphi 0, %s187
      %s190 = sphi 0, %s189
      %s204 = sphi 0, %s190
      %s208 = sphi 0, %s208
      %s210 = sphi 0, %s208
      %s211 = sphi 0, %s210
      %s225 = sphi 0, %s211
    $region4: #{tpu_custom_call.1} parent=1 // loop_header_branch
      %25 = sbr.rel (%p23) target = $region8
    $region5: #{tpu_custom_call.1} parent=1 // loop_body
      %s27 = ssub.s32 %s22, 1
      %s28 = ssub.s32 %s22, 2
      %s29 = sadd.s32 %s22, 1
      %s30 = ssub.s32 %s22, %s29
      %p31 = scmp.eq.s32.totalorder %s30, 0
      %s33 = sadd.s32 %s32, 1
      %s34 = scalar_select %p31, %s32, %s33
      %p37 = pneg %p31
      %p38 = scmp.eq.s32.totalorder %s22, 1
      %p39 = por %p37, %p38
      %p40 = scmp.ne.s32.totalorder %s32, %s35
      %p41 = scmp.eq.s32.totalorder %s22, 0
      %p42 = por %p40, %p41
      %p43 = scmp.ne.s32.totalorder %s32, %s35
      %p44 = scmp.eq.s32.totalorder %s27, 1
      %p45 = por %p43, %p44
      %p46 = scmp.ne.s32.totalorder %s35, %s36
      %p47 = scmp.eq.s32.totalorder %s27, 0
      %p48 = por %p46, %p47
      %p49 = scmp.ne.s32.totalorder %s35, %s36
      %p50 = scmp.eq.s32.totalorder %s28, 1
      %p51 = por %p49, %p50
      %p53 = scmp.ne.s32.totalorder %s36, %s52
      %p54 = scmp.eq.s32.totalorder %s28, 0
      %p55 = por %p53, %p54
      %s56 = ssub.s32 %s22, %s29
      %p57 = scmp.eq.s32.totalorder %s56, 0
      %s59 = sadd.s32 %s58, 1
      %s60 = scalar_select %p57, %s58, %s59
      %p63 = pneg %p57
      %p64 = scmp.eq.s32.totalorder %s22, 1
      %p65 = por %p63, %p64
      %p66 = scmp.ne.s32.totalorder %s58, %s61
      %p67 = scmp.eq.s32.totalorder %s22, 0
      %p68 = por %p66, %p67
      %p69 = scmp.ne.s32.totalorder %s58, %s61
      %p70 = scmp.eq.s32.totalorder %s27, 1
      %p71 = por %p69, %p70
      %p72 = scmp.ne.s32.totalorder %s61, %s62
      %p73 = scmp.eq.s32.totalorder %s27, 0
      %p74 = por %p72, %p73
      %p75 = scmp.ne.s32.totalorder %s61, %s62
      %p76 = scmp.eq.s32.totalorder %s28, 1
      %p77 = por %p75, %p76
      %p79 = scmp.ne.s32.totalorder %s62, %s78
      %p80 = scmp.eq.s32.totalorder %s28, 0
      %p81 = por %p79, %p80
      %s83 = sadd.s32 %s82, 1
      %p86 = scmp.eq.s32.totalorder %s22, 1
      %p87 = scmp.ne.s32.totalorder %s82, %s84
      %p88 = scmp.eq.s32.totalorder %s22, 0
      %p89 = por %p87, %p88
      %p90 = scmp.ne.s32.totalorder %s82, %s84
      %p91 = scmp.eq.s32.totalorder %s27, 1
      %p92 = por %p90, %p91
      %p93 = scmp.ne.s32.totalorder %s84, %s85
      %p94 = scmp.eq.s32.totalorder %s27, 0
      %p95 = por %p93, %p94
      %p96 = scmp.ne.s32.totalorder %s84, %s85
      %p97 = scmp.eq.s32.totalorder %s28, 1
      %p98 = por %p96, %p97
      %p100 = scmp.ne.s32.totalorder %s85, %s99
      %p101 = scmp.eq.s32.totalorder %s28, 0
      %p102 = por %p100, %p101
      %s104 = sadd.s32 %s103, 1
      %p107 = scmp.eq.s32.totalorder %s22, 1
      %p108 = scmp.ne.s32.totalorder %s103, %s105
      %p109 = scmp.eq.s32.totalorder %s22, 0
      %p110 = por %p108, %p109
      %p111 = scmp.ne.s32.totalorder %s103, %s105
      %p112 = scmp.eq.s32.totalorder %s27, 1
      %p113 = por %p111, %p112
      %p114 = scmp.ne.s32.totalorder %s105, %s106
      %p115 = scmp.eq.s32.totalorder %s27, 0
      %p116 = por %p114, %p115
      %p117 = scmp.ne.s32.totalorder %s105, %s106
      %p118 = scmp.eq.s32.totalorder %s28, 1
      %p119 = por %p117, %p118
      %p121 = scmp.ne.s32.totalorder %s106, %s120
      %p122 = scmp.eq.s32.totalorder %s28, 0
      %p123 = por %p121, %p122
      %s125 = sadd.s32 %s124, 1
      %p128 = scmp.eq.s32.totalorder %s22, 1
      %p129 = scmp.ne.s32.totalorder %s124, %s126
      %p130 = scmp.eq.s32.totalorder %s22, 0
      %p131 = por %p129, %p130
      %p132 = scmp.ne.s32.totalorder %s124, %s126
      %p133 = scmp.eq.s32.totalorder %s27, 1
      %p134 = por %p132, %p133
      %p135 = scmp.ne.s32.totalorder %s126, %s127
      %p136 = scmp.eq.s32.totalorder %s27, 0
      %p137 = por %p135, %p136
      %p138 = scmp.ne.s32.totalorder %s126, %s127
      %p139 = scmp.eq.s32.totalorder %s28, 1
      %p140 = por %p138, %p139
      %p142 = scmp.ne.s32.totalorder %s127, %s141
      %p143 = scmp.eq.s32.totalorder %s28, 0
      %p144 = por %p142, %p143
      %s146 = sadd.s32 %s145, 1
      %p149 = scmp.eq.s32.totalorder %s22, 1
      %p150 = scmp.ne.s32.totalorder %s145, %s147
      %p151 = scmp.eq.s32.totalorder %s22, 0
      %p152 = por %p150, %p151
      %p153 = scmp.ne.s32.totalorder %s145, %s147
      %p154 = scmp.eq.s32.totalorder %s27, 1
      %p155 = por %p153, %p154
      %p156 = scmp.ne.s32.totalorder %s147, %s148
      %p157 = scmp.eq.s32.totalorder %s27, 0
      %p158 = por %p156, %p157
      %p159 = scmp.ne.s32.totalorder %s147, %s148
      %p160 = scmp.eq.s32.totalorder %s28, 1
      %p161 = por %p159, %p160
      %p163 = scmp.ne.s32.totalorder %s148, %s162
      %p164 = scmp.eq.s32.totalorder %s28, 0
      %p165 = por %p163, %p164
      %s167 = sadd.s32 %s166, 1
      %p170 = scmp.eq.s32.totalorder %s22, 1
      %p171 = scmp.ne.s32.totalorder %s166, %s168
      %p172 = scmp.eq.s32.totalorder %s22, 0
      %p173 = por %p171, %p172
      %p174 = scmp.ne.s32.totalorder %s166, %s168
      %p175 = scmp.eq.s32.totalorder %s27, 1
      %p176 = por %p174, %p175
      %p177 = scmp.ne.s32.totalorder %s168, %s169
      %p178 = scmp.eq.s32.totalorder %s27, 0
      %p179 = por %p177, %p178
      %p180 = scmp.ne.s32.totalorder %s168, %s169
      %p181 = scmp.eq.s32.totalorder %s28, 1
      %p182 = por %p180, %p181
      %p184 = scmp.ne.s32.totalorder %s169, %s183
      %p185 = scmp.eq.s32.totalorder %s28, 0
      %p186 = por %p184, %p185
      %s188 = sadd.s32 %s187, 1
      %p191 = scmp.eq.s32.totalorder %s22, 1
      %p192 = scmp.ne.s32.totalorder %s187, %s189
      %p193 = scmp.eq.s32.totalorder %s22, 0
      %p194 = por %p192, %p193
      %p195 = scmp.ne.s32.totalorder %s187, %s189
      %p196 = scmp.eq.s32.totalorder %s27, 1
      %p197 = por %p195, %p196
      %p198 = scmp.ne.s32.totalorder %s189, %s190
      %p199 = scmp.eq.s32.totalorder %s27, 0
      %p200 = por %p198, %p199
      %p201 = scmp.ne.s32.totalorder %s189, %s190
      %p202 = scmp.eq.s32.totalorder %s28, 1
      %p203 = por %p201, %p202
      %p205 = scmp.ne.s32.totalorder %s190, %s204
      %p206 = scmp.eq.s32.totalorder %s28, 0
      %p207 = por %p205, %p206
      %s209 = sadd.s32 %s208, 1
      %p212 = scmp.eq.s32.totalorder %s22, 1
      %p213 = scmp.ne.s32.totalorder %s208, %s210
      %p214 = scmp.eq.s32.totalorder %s22, 0
      %p215 = por %p213, %p214
      %p216 = scmp.ne.s32.totalorder %s208, %s210
      %p217 = scmp.eq.s32.totalorder %s27, 1
      %p218 = por %p216, %p217
      %p219 = scmp.ne.s32.totalorder %s210, %s211
      %p220 = scmp.eq.s32.totalorder %s27, 0
      %p221 = por %p219, %p220
      %p222 = scmp.ne.s32.totalorder %s210, %s211
      %p223 = scmp.eq.s32.totalorder %s28, 1
      %p224 = por %p222, %p223
      %p226 = scmp.ne.s32.totalorder %s211, %s225
      %p227 = scmp.eq.s32.totalorder %s28, 0
      %p228 = por %p226, %p227
      %p229 = scmp.le.s32.totalorder 1, %s22
      %p230 = scmp.lt.s32.totalorder %s22, 3
      %p231 = pnand %p229, %p230
      %p232 = pneg %p231
      // Predicated region
      $region9: #{tpu_custom_call.1} parent=5 // pred_check
        _
      $region10: #{tpu_custom_call.1} parent=5 // pred_check_branch
        %234 = sbr.rel (%p231) target = $region12
      $region11: #{tpu_custom_call.1} parent=5 // pred_region
        %s235 = ssub.s32 %s22, 1
        // Predicated region
        $region13: #{tpu_custom_call.1} parent=11 // pred_check
          %p236 = pneg %p95
        $region14: #{tpu_custom_call.1} parent=11 // pred_check_branch
          %238 = sbr.rel (%p236) target = $region16
        $region15: #{tpu_custom_call.1} parent=11 // pred_region
          %240 = vsyncadd [#allocation8], 0
          %s241 = sshll.u32 %s2, 4
          %s242 = int_to_ptr.hbm [resolvable:$true] %s241
          %s243 = sshll.u32 [#allocation9], 4
          %s244 = int_to_ptr.vmem [resolvable:$true] %s243
          %249 = dma.hbm_to_vmem [thread:$0]  %s242, 2048, %s244, [#allocation8], 128, 128, 8
        $region16: #{tpu_custom_call.1} parent=11 // pred_fallthru
          _
        // Predicated region
        $region17: #{tpu_custom_call.1} parent=11 // pred_check
          %p250 = pneg %p116
        $region18: #{tpu_custom_call.1} parent=11 // pred_check_branch
          %252 = sbr.rel (%p250) target = $region20
        $region19: #{tpu_custom_call.1} parent=11 // pred_region
          _
        $region20: #{tpu_custom_call.1} parent=11 // pred_fallthru
          _
        // Predicated region
        $region21: #{tpu_custom_call.1} parent=11 // pred_check
          %p253 = pneg %p137
        $region22: #{tpu_custom_call.1} parent=11 // pred_check_branch
          %255 = sbr.rel (%p253) target = $region24
        $region23: #{tpu_custom_call.1} parent=11 // pred_region
          %257 = vsyncadd [#allocation11], 0
          %s258 = sshll.u32 %s4, 4
          %s259 = int_to_ptr.hbm [resolvable:$true] %s258
          %s260 = sshll.u32 [#allocation10], 4
          %s261 = int_to_ptr.vmem [resolvable:$true] %s260
          %266 = dma.hbm_to_vmem [thread:$0]  %s259, 2048, %s261, [#allocation11], 128, 128, 8
        $region24: #{tpu_custom_call.1} parent=11 // pred_fallthru
          _
        // Predicated region
        $region25: #{tpu_custom_call.1} parent=11 // pred_check
          %p267 = pneg %p158
        $region26: #{tpu_custom_call.1} parent=11 // pred_check_branch
          %269 = sbr.rel (%p267) target = $region28
        $region27: #{tpu_custom_call.1} parent=11 // pred_region
          _
        $region28: #{tpu_custom_call.1} parent=11 // pred_fallthru
          _
        // Predicated region
        $region29: #{tpu_custom_call.1} parent=11 // pred_check
          %p270 = pneg %p179
        $region30: #{tpu_custom_call.1} parent=11 // pred_check_branch
          %272 = sbr.rel (%p270) target = $region32
        $region31: #{tpu_custom_call.1} parent=11 // pred_region
          %274 = vsyncadd [#allocation11], 0
          %s275 = sshll.u32 %s6, 4
          %s276 = int_to_ptr.hbm [resolvable:$true] %s275
          %s277 = sshll.u32 [#allocation12], 4
          %s278 = int_to_ptr.vmem [resolvable:$true] %s277
          %283 = dma.hbm_to_vmem [thread:$0]  %s276, 2048, %s278, [#allocation11], 128, 128, 8
        $region32: #{tpu_custom_call.1} parent=11 // pred_fallthru
          _
        // Predicated region
        $region33: #{tpu_custom_call.1} parent=11 // pred_check
          %p284 = pneg %p200
        $region34: #{tpu_custom_call.1} parent=11 // pred_check_branch
          %286 = sbr.rel (%p284) target = $region36
        $region35: #{tpu_custom_call.1} parent=11 // pred_region
          _
        $region36: #{tpu_custom_call.1} parent=11 // pred_fallthru
          _
      $region12: #{tpu_custom_call.1} parent=5 // pred_fallthru
        _
      %p287 = scmp.lt.s32.totalorder %s22, 2
      // Predicated region
      $region37: #{tpu_custom_call.1} parent=5 // pred_check
        %p288 = pneg %p287
      $region38: #{tpu_custom_call.1} parent=5 // pred_check_branch
        %290 = sbr.rel (%p288) target = $region40
      $region39: #{tpu_custom_call.1} parent=5 // pred_region
        // Predicated region
        $region41: #{tpu_custom_call.1} parent=39 // pred_check
          %p291 = pneg %p42
        $region42: #{tpu_custom_call.1} parent=39 // pred_check_branch
          %293 = sbr.rel (%p291) target = $region44
        $region43: #{tpu_custom_call.1} parent=39 // pred_region
          %s294 = sand.u32 %s32, 1
          %s295 = scalar_lea.sflag [#allocation5], %s294
          %s296 = sand.u32 %s32, 1
          %s297 = smul.addr %s296, 128
          %s298 = scalar_lea.vmem [#allocation4], %s297
          %s299 = smul.u32 16, %s22
          %301 = vsyncadd %s295, 0
          %s302 = smul.addr %s299, 8
          %s303 = scalar_lea.hbm %s0, %s302
          %s304 = sshll.u32 %s303, 4
          %s305 = int_to_ptr.hbm [resolvable:$true] %s304
          %s306 = sshll.u32 %s298, 4
          %s307 = int_to_ptr.vmem [resolvable:$true] %s306
          %312 = dma.hbm_to_vmem [thread:$0]  %s305, 2048, %s307, %s295, 128, 128, 8
        $region44: #{tpu_custom_call.1} parent=39 // pred_fallthru
          _
        // Predicated region
        $region45: #{tpu_custom_call.1} parent=39 // pred_check
          %p313 = pneg %p68
        $region46: #{tpu_custom_call.1} parent=39 // pred_check_branch
          %315 = sbr.rel (%p313) target = $region48
        $region47: #{tpu_custom_call.1} parent=39 // pred_region
          %s316 = sand.u32 %s22, 1
          %s317 = scalar_lea.sflag [#allocation8], %s316
          %s318 = sand.u32 %s58, 1
          %s319 = smul.addr %s318, 4
          %s320 = scalar_lea.vmem [#allocation7], %s319
          %322 = vsyncadd %s317, 0
          %s323 = smul.addr %s22, 4
          %s324 = scalar_lea.hbm %s1, %s323
          %s326 = sshll.u32 %s324, 4
          %s327 = int_to_ptr.hbm [resolvable:$true] %s326
          %s328 = sshll.u32 %s320, 4
          %s329 = int_to_ptr.vmem [resolvable:$true] %s328
          %331 = dma.hbm_to_vmem [thread:$0]  %s327, 64, %s329, %s317
        $region48: #{tpu_custom_call.1} parent=39 // pred_fallthru
          _
      $region40: #{tpu_custom_call.1} parent=5 // pred_fallthru
        _
      %p332 = scmp.le.s32.totalorder 1, %s22
      %p333 = scmp.lt.s32.totalorder %s22, 3
      %p334 = pnand %p332, %p333
      %p335 = pneg %p334
      // Predicated region
      $region49: #{tpu_custom_call.1} parent=5 // pred_check
        _
      $region50: #{tpu_custom_call.1} parent=5 // pred_check_branch
        %337 = sbr.rel (%p334) target = $region52
      $region51: #{tpu_custom_call.1} parent=5 // pred_region
        %s338 = ssub.s32 %s22, 1
        %s339 = sand.u32 %s35, 1
        %s340 = scalar_lea.sflag [#allocation5], %s339
        %s341 = sand.u32 %s35, 1
        %s342 = smul.addr %s341, 128
        %s343 = scalar_lea.vmem [#allocation4], %s342
        // Predicated region
        $region53: #{tpu_custom_call.1} parent=51 // pred_check
          %p344 = pneg %p48
        $region54: #{tpu_custom_call.1} parent=51 // pred_check_branch
          %346 = sbr.rel (%p344) target = $region56
        $region55: #{tpu_custom_call.1} parent=51 // pred_region
          %348 = dma.done %s340, 2048
        $region56: #{tpu_custom_call.1} parent=51 // pred_fallthru
          _
        %s349 = sand.u32 %s27, 1
        %s350 = scalar_lea.sflag [#allocation8], %s349
        %s351 = sand.u32 %s61, 1
        %s352 = smul.addr %s351, 4
        %s353 = scalar_lea.vmem [#allocation7], %s352
        // Predicated region
        $region57: #{tpu_custom_call.1} parent=51 // pred_check
          %p354 = pneg %p74
        $region58: #{tpu_custom_call.1} parent=51 // pred_check_branch
          %356 = sbr.rel (%p354) target = $region60
        $region59: #{tpu_custom_call.1} parent=51 // pred_region
          %358 = dma.done %s350, 64
        $region60: #{tpu_custom_call.1} parent=51 // pred_fallthru
          _
        // Predicated region
        $region61: #{tpu_custom_call.1} parent=51 // pred_check
          %p359 = pneg %p95
        $region62: #{tpu_custom_call.1} parent=51 // pred_check_branch
          %361 = sbr.rel (%p359) target = $region64
        $region63: #{tpu_custom_call.1} parent=51 // pred_region
          %363 = dma.done [#allocation8], 2048
        $region64: #{tpu_custom_call.1} parent=51 // pred_fallthru
          _
        // Predicated region
        $region65: #{tpu_custom_call.1} parent=51 // pred_check
          %p364 = pneg %p137
        $region66: #{tpu_custom_call.1} parent=51 // pred_check_branch
          %366 = sbr.rel (%p364) target = $region68
        $region67: #{tpu_custom_call.1} parent=51 // pred_region
          %368 = dma.done [#allocation11], 2048
        $region68: #{tpu_custom_call.1} parent=51 // pred_fallthru
          _
        // Predicated region
        $region69: #{tpu_custom_call.1} parent=51 // pred_check
          %p369 = pneg %p179
        $region70: #{tpu_custom_call.1} parent=51 // pred_check_branch
          %371 = sbr.rel (%p369) target = $region72
        $region71: #{tpu_custom_call.1} parent=51 // pred_region
          %373 = dma.done [#allocation11], 2048
        $region72: #{tpu_custom_call.1} parent=51 // pred_fallthru
          _
        %s374 = sand.u32 %s35, 1
        %s375 = scalar_lea.sflag [#allocation5], %s374
        %s376 = sand.u32 %s35, 1
        %s377 = smul.addr %s376, 128
        %s378 = scalar_lea.vmem [#allocation4], %s377
        %p379 = pneg %p48
        %p380 = pneg %p45
        %s381 = sand.u32 %s27, 1
        %s382 = scalar_lea.sflag [#allocation8], %s381
        %s383 = sand.u32 %s61, 1
        %s384 = smul.addr %s383, 4
        %s385 = scalar_lea.vmem [#allocation7], %s384
        %p386 = pneg %p74
        %p387 = pneg %p71
        %p388 = pneg %p95
        %p389 = pneg %p92
        %p390 = pneg %p116
        %p391 = pneg %p113
        %p392 = pneg %p137
        %p393 = pneg %p134
        %p394 = pneg %p158
        %p395 = pneg %p155
        %p396 = pneg %p179
        %p397 = pneg %p176
        %p398 = pneg %p200
        %p399 = pneg %p197
        %p400 = pneg %p221
        %p401 = pneg %p218
        %s402 = smul.u32 16, %s27
        %p403 = scmp.eq.s32.totalorder %s27, 0
        // Predicated region
        $region73: #{tpu_custom_call.1} parent=51 // pred_check
          %p404 = pneg %p403
        $region74: #{tpu_custom_call.1} parent=51 // pred_check_branch
          %406 = sbr.rel (%p404) target = $region76
        $region75: #{tpu_custom_call.1} parent=51 // pred_region
          %407 = vst [vmem:[#allocation2] sm:$0x1] -1e+30
          %408 = vst [vmem:[#allocation3] sm:$0xff] 0.0
          %409 = vst [vmem:[#allocation13] sm:$0xff] 0.0
        $region76: #{tpu_custom_call.1} parent=51 // pred_fallthru
          _
        %v410 = vld [vmem:[%s343] sm:$0xff]
        %v411 = vld [vmem:[%s343 + $0x8] sm:$0xff]
        %v412 = vld [vmem:[%s343 + $0x10] sm:$0xff]
        %v413 = vld [vmem:[%s343 + $0x18] sm:$0xff]
        %v414 = vld [vmem:[%s343 + $0x20] sm:$0xff]
        %v415 = vld [vmem:[%s343 + $0x28] sm:$0xff]
        %v416 = vld [vmem:[%s343 + $0x30] sm:$0xff]
        %v417 = vld [vmem:[%s343 + $0x38] sm:$0xff]
        %v418 = vld [vmem:[%s343 + $0x40] sm:$0xff]
        %v419 = vld [vmem:[%s343 + $0x48] sm:$0xff]
        %v420 = vld [vmem:[%s343 + $0x50] sm:$0xff]
        %v421 = vld [vmem:[%s343 + $0x58] sm:$0xff]
        %v422 = vld [vmem:[%s343 + $0x60] sm:$0xff]
        %v423 = vld [vmem:[%s343 + $0x68] sm:$0xff]
        %v424 = vld [vmem:[%s343 + $0x70] sm:$0xff]
        %v425 = vld [vmem:[%s343 + $0x78] sm:$0xff]
        %v426 = vld [vmem:[#allocation9] sm:$0xff]
        %v427 = vld [vmem:[#allocation9 + $0x8] sm:$0xff]
        %v428 = vld [vmem:[#allocation9 + $0x10] sm:$0xff]
        %v429 = vld [vmem:[#allocation9 + $0x18] sm:$0xff]
        %v430 = vld [vmem:[#allocation9 + $0x20] sm:$0xff]
        %v431 = vld [vmem:[#allocation9 + $0x28] sm:$0xff]
        %v432 = vld [vmem:[#allocation9 + $0x30] sm:$0xff]
        %v433 = vld [vmem:[#allocation9 + $0x38] sm:$0xff]
        %v434 = vld [vmem:[#allocation9 + $0x40] sm:$0xff]
        %v435 = vld [vmem:[#allocation9 + $0x48] sm:$0xff]
        %v436 = vld [vmem:[#allocation9 + $0x50] sm:$0xff]
        %v437 = vld [vmem:[#allocation9 + $0x58] sm:$0xff]
        %v438 = vld [vmem:[#allocation9 + $0x60] sm:$0xff]
        %v439 = vld [vmem:[#allocation9 + $0x68] sm:$0xff]
        %v440 = vld [vmem:[#allocation9 + $0x70] sm:$0xff]
        %v441 = vld [vmem:[#allocation9 + $0x78] sm:$0xff]
        %v442 = vld [vmem:[%s3] sm:$0x1]
        %v444 = vperm.slane %v442, 0
        %446 = vmatpush.msra.mxu0 %v441
        %447 = vmatpush.msra.mxu0 %v440
        %448 = vmatpush.msra.mxu0 %v439
        %449 = vmatpush.msra.mxu0 %v438
        %450 = vmatpush.msra.mxu0 %v437
        %451 = vmatpush.msra.mxu0 %v436
        %452 = vmatpush.msra.mxu0 %v435
        %453 = vmatpush.msra.mxu0 %v434
        %454 = vmatpush.msra.mxu0 %v433
        %455 = vmatpush.msra.mxu0 %v432
        %456 = vmatpush.msra.mxu0 %v431
        %457 = vmatpush.msra.mxu0 %v430
        %458 = vmatpush.msra.mxu0 %v429
        %459 = vmatpush.msra.mxu0 %v428
        %460 = vmatpush.msra.mxu0 %v427
        %461 = vmatpush.msra.mxu0 %v426
        %462 = vmatmul.f32.gmra.mxu0 %v410
        %v463 = vpop.f32.mrf.mxu0
        %v464 = vadd.f32 %v444, %v463
        %465 = vmatmul.f32.gmra.mxu0 %v411
        %v466 = vpop.f32.mrf.mxu0
        %v467 = vadd.f32 %v444, %v466
        %468 = vmatmul.f32.gmra.mxu0 %v412
        %v469 = vpop.f32.mrf.mxu0
        %v470 = vadd.f32 %v444, %v469
        %471 = vmatmul.f32.gmra.mxu0 %v413
        %v472 = vpop.f32.mrf.mxu0
        %v473 = vadd.f32 %v444, %v472
        %474 = vmatmul.f32.gmra.mxu0 %v414
        %v475 = vpop.f32.mrf.mxu0
        %v476 = vadd.f32 %v444, %v475
        %477 = vmatmul.f32.gmra.mxu0 %v415
        %v478 = vpop.f32.mrf.mxu0
        %v479 = vadd.f32 %v444, %v478
        %480 = vmatmul.f32.gmra.mxu0 %v416
        %v481 = vpop.f32.mrf.mxu0
        %v482 = vadd.f32 %v444, %v481
        %483 = vmatmul.f32.gmra.mxu0 %v417
        %v484 = vpop.f32.mrf.mxu0
        %v485 = vadd.f32 %v444, %v484
        %486 = vmatmul.f32.gmra.mxu0 %v418
        %v487 = vpop.f32.mrf.mxu0
        %v488 = vadd.f32 %v444, %v487
        %489 = vmatmul.f32.gmra.mxu0 %v419
        %v490 = vpop.f32.mrf.mxu0
        %v491 = vadd.f32 %v444, %v490
        %492 = vmatmul.f32.gmra.mxu0 %v420
        %v493 = vpop.f32.mrf.mxu0
        %v494 = vadd.f32 %v444, %v493
        %495 = vmatmul.f32.gmra.mxu0 %v421
        %v496 = vpop.f32.mrf.mxu0
        %v497 = vadd.f32 %v444, %v496
        %498 = vmatmul.f32.gmra.mxu0 %v422
        %v499 = vpop.f32.mrf.mxu0
        %v500 = vadd.f32 %v444, %v499
        %501 = vmatmul.f32.gmra.mxu0 %v423
        %v502 = vpop.f32.mrf.mxu0
        %v503 = vadd.f32 %v444, %v502
        %504 = vmatmul.f32.gmra.mxu0 %v424
        %v505 = vpop.f32.mrf.mxu0
        %v506 = vadd.f32 %v444, %v505
        %507 = vmatmul.f32.gmra.mxu0 %v425
        %v508 = vpop.f32.mrf.mxu0
        %v509 = vadd.f32 %v444, %v508
        %510 = vdwg.mxu0
        %v511 = vand.u32 2147483647, %v464
        %v512 = vand.u32 2147483647, %v467
        %v513 = vand.u32 2147483647, %v470
        %v514 = vand.u32 2147483647, %v473
        %v515 = vand.u32 2147483647, %v476
        %v516 = vand.u32 2147483647, %v479
        %v517 = vand.u32 2147483647, %v482
        %v518 = vand.u32 2147483647, %v485
        %v519 = vand.u32 2147483647, %v488
        %v520 = vand.u32 2147483647, %v491
        %v521 = vand.u32 2147483647, %v494
        %v522 = vand.u32 2147483647, %v497
        %v523 = vand.u32 2147483647, %v500
        %v524 = vand.u32 2147483647, %v503
        %v525 = vand.u32 2147483647, %v506
        %v526 = vand.u32 2147483647, %v509
        %v527 = vadd.f32 %v511, 1.0
        %v528 = vadd.f32 %v512, 1.0
        %v529 = vadd.f32 %v513, 1.0
        %v530 = vadd.f32 %v514, 1.0
        %v531 = vadd.f32 %v515, 1.0
        %v532 = vadd.f32 %v516, 1.0
        %v533 = vadd.f32 %v517, 1.0
        %v534 = vadd.f32 %v518, 1.0
        %v535 = vadd.f32 %v519, 1.0
        %v536 = vadd.f32 %v520, 1.0
        %v537 = vadd.f32 %v521, 1.0
        %v538 = vadd.f32 %v522, 1.0
        %v539 = vadd.f32 %v523, 1.0
        %v540 = vadd.f32 %v524, 1.0
        %v541 = vadd.f32 %v525, 1.0
        %v542 = vadd.f32 %v526, 1.0
        %v543 = vrcp.pop %v527
        %v544 = vmul.f32 %v527, %v543
        %v545 = vsub.f32 1.0, %v544
        %v546 = vmul.f32 %v543, %v545
        %v547 = vadd.f32 %v543, %v546
        %vm548 = vweird.f32 %v527
        %vm549 = vweird.f32 %v543
        %vm550 = vmor %vm548, %vm549
        %v551 = vsel %vm550, %v543, %v547
        %v552 = vand.u32 2147483647, %v527
        %vm553 = vcmp.eq.f32.partialorder %v552, 8.507059e+37
        %v554 = vand.u32 %v527, 2147483648
        %v555 = vor.u32 1.1754944e-38, %v554
        %v556 = vsel %vm553, %v555, %v551
        %v557 = vmul.f32 %v464, %v556
        %v558 = vrcp.pop %v528
        %v559 = vmul.f32 %v528, %v558
        %v560 = vsub.f32 1.0, %v559
        %v561 = vmul.f32 %v558, %v560
        %v562 = vadd.f32 %v558, %v561
        %vm563 = vweird.f32 %v528
        %vm564 = vweird.f32 %v558
        %vm565 = vmor %vm563, %vm564
        %v566 = vsel %vm565, %v558, %v562
        %v567 = vand.u32 2147483647, %v528
        %vm568 = vcmp.eq.f32.partialorder %v567, 8.507059e+37
        %v569 = vand.u32 %v528, 2147483648
        %v570 = vor.u32 1.1754944e-38, %v569
        %v571 = vsel %vm568, %v570, %v566
        %v572 = vmul.f32 %v467, %v571
        %v573 = vrcp.pop %v529
        %v574 = vmul.f32 %v529, %v573
        %v575 = vsub.f32 1.0, %v574
        %v576 = vmul.f32 %v573, %v575
        %v577 = vadd.f32 %v573, %v576
        %vm578 = vweird.f32 %v529
        %vm579 = vweird.f32 %v573
        %vm580 = vmor %vm578, %vm579
        %v581 = vsel %vm580, %v573, %v577
        %v582 = vand.u32 2147483647, %v529
        %vm583 = vcmp.eq.f32.partialorder %v582, 8.507059e+37
        %v584 = vand.u32 %v529, 2147483648
        %v585 = vor.u32 1.1754944e-38, %v584
        %v586 = vsel %vm583, %v585, %v581
        %v587 = vmul.f32 %v470, %v586
        %v588 = vrcp.pop %v530
        %v589 = vmul.f32 %v530, %v588
        %v590 = vsub.f32 1.0, %v589
        %v591 = vmul.f32 %v588, %v590
        %v592 = vadd.f32 %v588, %v591
        %vm593 = vweird.f32 %v530
        %vm594 = vweird.f32 %v588
        %vm595 = vmor %vm593, %vm594
        %v596 = vsel %vm595, %v588, %v592
        %v597 = vand.u32 2147483647, %v530
        %vm598 = vcmp.eq.f32.partialorder %v597, 8.507059e+37
        %v599 = vand.u32 %v530, 2147483648
        %v600 = vor.u32 1.1754944e-38, %v599
        %v601 = vsel %vm598, %v600, %v596
        %v602 = vmul.f32 %v473, %v601
        %v603 = vrcp.pop %v531
        %v604 = vmul.f32 %v531, %v603
        %v605 = vsub.f32 1.0, %v604
        %v606 = vmul.f32 %v603, %v605
        %v607 = vadd.f32 %v603, %v606
        %vm608 = vweird.f32 %v531
        %vm609 = vweird.f32 %v603
        %vm610 = vmor %vm608, %vm609
        %v611 = vsel %vm610, %v603, %v607
        %v612 = vand.u32 2147483647, %v531
        %vm613 = vcmp.eq.f32.partialorder %v612, 8.507059e+37
        %v614 = vand.u32 %v531, 2147483648
        %v615 = vor.u32 1.1754944e-38, %v614
        %v616 = vsel %vm613, %v615, %v611
        %v617 = vmul.f32 %v476, %v616
        %v618 = vrcp.pop %v532
        %v619 = vmul.f32 %v532, %v618
        %v620 = vsub.f32 1.0, %v619
        %v621 = vmul.f32 %v618, %v620
        %v622 = vadd.f32 %v618, %v621
        %vm623 = vweird.f32 %v532
        %vm624 = vweird.f32 %v618
        %vm625 = vmor %vm623, %vm624
        %v626 = vsel %vm625, %v618, %v622
        %v627 = vand.u32 2147483647, %v532
        %vm628 = vcmp.eq.f32.partialorder %v627, 8.507059e+37
        %v629 = vand.u32 %v532, 2147483648
        %v630 = vor.u32 1.1754944e-38, %v629
        %v631 = vsel %vm628, %v630, %v626
        %v632 = vmul.f32 %v479, %v631
        %v633 = vrcp.pop %v533
        %v634 = vmul.f32 %v533, %v633
        %v635 = vsub.f32 1.0, %v634
        %v636 = vmul.f32 %v633, %v635
        %v637 = vadd.f32 %v633, %v636
        %vm638 = vweird.f32 %v533
        %vm639 = vweird.f32 %v633
        %vm640 = vmor %vm638, %vm639
        %v641 = vsel %vm640, %v633, %v637
        %v642 = vand.u32 2147483647, %v533
        %vm643 = vcmp.eq.f32.partialorder %v642, 8.507059e+37
        %v644 = vand.u32 %v533, 2147483648
        %v645 = vor.u32 1.1754944e-38, %v644
        %v646 = vsel %vm643, %v645, %v641
        %v647 = vmul.f32 %v482, %v646
        %v648 = vrcp.pop %v534
        %v649 = vmul.f32 %v534, %v648
        %v650 = vsub.f32 1.0, %v649
        %v651 = vmul.f32 %v648, %v650
        %v652 = vadd.f32 %v648, %v651
        %vm653 = vweird.f32 %v534
        %vm654 = vweird.f32 %v648
        %vm655 = vmor %vm653, %vm654
        %v656 = vsel %vm655, %v648, %v652
        %v657 = vand.u32 2147483647, %v534
        %vm658 = vcmp.eq.f32.partialorder %v657, 8.507059e+37
        %v659 = vand.u32 %v534, 2147483648
        %v660 = vor.u32 1.1754944e-38, %v659
        %v661 = vsel %vm658, %v660, %v656
        %v662 = vmul.f32 %v485, %v661
        %v663 = vrcp.pop %v535
        %v664 = vmul.f32 %v535, %v663
        %v665 = vsub.f32 1.0, %v664
        %v666 = vmul.f32 %v663, %v665
        %v667 = vadd.f32 %v663, %v666
        %vm668 = vweird.f32 %v535
        %vm669 = vweird.f32 %v663
        %vm670 = vmor %vm668, %vm669
        %v671 = vsel %vm670, %v663, %v667
        %v672 = vand.u32 2147483647, %v535
        %vm673 = vcmp.eq.f32.partialorder %v672, 8.507059e+37
        %v674 = vand.u32 %v535, 2147483648
        %v675 = vor.u32 1.1754944e-38, %v674
        %v676 = vsel %vm673, %v675, %v671
        %v677 = vmul.f32 %v488, %v676
        %v678 = vrcp.pop %v536
        %v679 = vmul.f32 %v536, %v678
        %v680 = vsub.f32 1.0, %v679
        %v681 = vmul.f32 %v678, %v680
        %v682 = vadd.f32 %v678, %v681
        %vm683 = vweird.f32 %v536
        %vm684 = vweird.f32 %v678
        %vm685 = vmor %vm683, %vm684
        %v686 = vsel %vm685, %v678, %v682
        %v687 = vand.u32 2147483647, %v536
        %vm688 = vcmp.eq.f32.partialorder %v687, 8.507059e+37
        %v689 = vand.u32 %v536, 2147483648
        %v690 = vor.u32 1.1754944e-38, %v689
        %v691 = vsel %vm688, %v690, %v686
        %v692 = vmul.f32 %v491, %v691
        %v693 = vrcp.pop %v537
        %v694 = vmul.f32 %v537, %v693
        %v695 = vsub.f32 1.0, %v694
        %v696 = vmul.f32 %v693, %v695
        %v697 = vadd.f32 %v693, %v696
        %vm698 = vweird.f32 %v537
        %vm699 = vweird.f32 %v693
        %vm700 = vmor %vm698, %vm699
        %v701 = vsel %vm700, %v693, %v697
        %v702 = vand.u32 2147483647, %v537
        %vm703 = vcmp.eq.f32.partialorder %v702, 8.507059e+37
        %v704 = vand.u32 %v537, 2147483648
        %v705 = vor.u32 1.1754944e-38, %v704
        %v706 = vsel %vm703, %v705, %v701
        %v707 = vmul.f32 %v494, %v706
        %v708 = vrcp.pop %v538
        %v709 = vmul.f32 %v538, %v708
        %v710 = vsub.f32 1.0, %v709
        %v711 = vmul.f32 %v708, %v710
        %v712 = vadd.f32 %v708, %v711
        %vm713 = vweird.f32 %v538
        %vm714 = vweird.f32 %v708
        %vm715 = vmor %vm713, %vm714
        %v716 = vsel %vm715, %v708, %v712
        %v717 = vand.u32 2147483647, %v538
        %vm718 = vcmp.eq.f32.partialorder %v717, 8.507059e+37
        %v719 = vand.u32 %v538, 2147483648
        %v720 = vor.u32 1.1754944e-38, %v719
        %v721 = vsel %vm718, %v720, %v716
        %v722 = vmul.f32 %v497, %v721
        %v723 = vrcp.pop %v539
        %v724 = vmul.f32 %v539, %v723
        %v725 = vsub.f32 1.0, %v724
        %v726 = vmul.f32 %v723, %v725
        %v727 = vadd.f32 %v723, %v726
        %vm728 = vweird.f32 %v539
        %vm729 = vweird.f32 %v723
        %vm730 = vmor %vm728, %vm729
        %v731 = vsel %vm730, %v723, %v727
        %v732 = vand.u32 2147483647, %v539
        %vm733 = vcmp.eq.f32.partialorder %v732, 8.507059e+37
        %v734 = vand.u32 %v539, 2147483648
        %v735 = vor.u32 1.1754944e-38, %v734
        %v736 = vsel %vm733, %v735, %v731
        %v737 = vmul.f32 %v500, %v736
        %v738 = vrcp.pop %v540
        %v739 = vmul.f32 %v540, %v738
        %v740 = vsub.f32 1.0, %v739
        %v741 = vmul.f32 %v738, %v740
        %v742 = vadd.f32 %v738, %v741
        %vm743 = vweird.f32 %v540
        %vm744 = vweird.f32 %v738
        %vm745 = vmor %vm743, %vm744
        %v746 = vsel %vm745, %v738, %v742
        %v747 = vand.u32 2147483647, %v540
        %vm748 = vcmp.eq.f32.partialorder %v747, 8.507059e+37
        %v749 = vand.u32 %v540, 2147483648
        %v750 = vor.u32 1.1754944e-38, %v749
        %v751 = vsel %vm748, %v750, %v746
        %v752 = vmul.f32 %v503, %v751
        %v753 = vrcp.pop %v541
        %v754 = vmul.f32 %v541, %v753
        %v755 = vsub.f32 1.0, %v754
        %v756 = vmul.f32 %v753, %v755
        %v757 = vadd.f32 %v753, %v756
        %vm758 = vweird.f32 %v541
        %vm759 = vweird.f32 %v753
        %vm760 = vmor %vm758, %vm759
        %v761 = vsel %vm760, %v753, %v757
        %v762 = vand.u32 2147483647, %v541
        %vm763 = vcmp.eq.f32.partialorder %v762, 8.507059e+37
        %v764 = vand.u32 %v541, 2147483648
        %v765 = vor.u32 1.1754944e-38, %v764
        %v766 = vsel %vm763, %v765, %v761
        %v767 = vmul.f32 %v506, %v766
        %v768 = vrcp.pop %v542
        %v769 = vmul.f32 %v542, %v768
        %v770 = vsub.f32 1.0, %v769
        %v771 = vmul.f32 %v768, %v770
        %v772 = vadd.f32 %v768, %v771
        %vm773 = vweird.f32 %v542
        %vm774 = vweird.f32 %v768
        %vm775 = vmor %vm773, %vm774
        %v776 = vsel %vm775, %v768, %v772
        %v777 = vand.u32 2147483647, %v542
        %vm778 = vcmp.eq.f32.partialorder %v777, 8.507059e+37
        %v779 = vand.u32 %v542, 2147483648
        %v780 = vor.u32 1.1754944e-38, %v779
        %v781 = vsel %vm778, %v780, %v776
        %v782 = vmul.f32 %v509, %v781
        %v783 = vld [vmem:[#allocation10] sm:$0xff]
        %v784 = vld [vmem:[#allocation10 + $0x8] sm:$0xff]
        %v785 = vld [vmem:[#allocation10 + $0x10] sm:$0xff]
        %v786 = vld [vmem:[#allocation10 + $0x18] sm:$0xff]
        %v787 = vld [vmem:[#allocation10 + $0x20] sm:$0xff]
        %v788 = vld [vmem:[#allocation10 + $0x28] sm:$0xff]
        %v789 = vld [vmem:[#allocation10 + $0x30] sm:$0xff]
        %v790 = vld [vmem:[#allocation10 + $0x38] sm:$0xff]
        %v791 = vld [vmem:[#allocation10 + $0x40] sm:$0xff]
        %v792 = vld [vmem:[#allocation10 + $0x48] sm:$0xff]
        %v793 = vld [vmem:[#allocation10 + $0x50] sm:$0xff]
        %v794 = vld [vmem:[#allocation10 + $0x58] sm:$0xff]
        %v795 = vld [vmem:[#allocation10 + $0x60] sm:$0xff]
        %v796 = vld [vmem:[#allocation10 + $0x68] sm:$0xff]
        %v797 = vld [vmem:[#allocation10 + $0x70] sm:$0xff]
        %v798 = vld [vmem:[#allocation10 + $0x78] sm:$0xff]
        %v799 = vld [vmem:[%s5] sm:$0x1]
        %v801 = vperm.slane %v799, 0
        %803 = vmatpush.msra.mxu0 %v798
        %804 = vmatpush.msra.mxu0 %v797
        %805 = vmatpush.msra.mxu0 %v796
        %806 = vmatpush.msra.mxu0 %v795
        %807 = vmatpush.msra.mxu0 %v794
        %808 = vmatpush.msra.mxu0 %v793
        %809 = vmatpush.msra.mxu0 %v792
        %810 = vmatpush.msra.mxu0 %v791
        %811 = vmatpush.msra.mxu0 %v790
        %812 = vmatpush.msra.mxu0 %v789
        %813 = vmatpush.msra.mxu0 %v788
        %814 = vmatpush.msra.mxu0 %v787
        %815 = vmatpush.msra.mxu0 %v786
        %816 = vmatpush.msra.mxu0 %v785
        %817 = vmatpush.msra.mxu0 %v784
        %818 = vmatpush.msra.mxu0 %v783
        %819 = vmatmul.f32.gmra.mxu0 %v557
        %v820 = vpop.f32.mrf.mxu0
        %v821 = vadd.f32 %v801, %v820
        %822 = vmatmul.f32.gmra.mxu0 %v572
        %v823 = vpop.f32.mrf.mxu0
        %v824 = vadd.f32 %v801, %v823
        %825 = vmatmul.f32.gmra.mxu0 %v587
        %v826 = vpop.f32.mrf.mxu0
        %v827 = vadd.f32 %v801, %v826
        %828 = vmatmul.f32.gmra.mxu0 %v602
        %v829 = vpop.f32.mrf.mxu0
        %v830 = vadd.f32 %v801, %v829
        %831 = vmatmul.f32.gmra.mxu0 %v617
        %v832 = vpop.f32.mrf.mxu0
        %v833 = vadd.f32 %v801, %v832
        %834 = vmatmul.f32.gmra.mxu0 %v632
        %v835 = vpop.f32.mrf.mxu0
        %v836 = vadd.f32 %v801, %v835
        %837 = vmatmul.f32.gmra.mxu0 %v647
        %v838 = vpop.f32.mrf.mxu0
        %v839 = vadd.f32 %v801, %v838
        %840 = vmatmul.f32.gmra.mxu0 %v662
        %v841 = vpop.f32.mrf.mxu0
        %v842 = vadd.f32 %v801, %v841
        %843 = vmatmul.f32.gmra.mxu0 %v677
        %v844 = vpop.f32.mrf.mxu0
        %v845 = vadd.f32 %v801, %v844
        %846 = vmatmul.f32.gmra.mxu0 %v692
        %v847 = vpop.f32.mrf.mxu0
        %v848 = vadd.f32 %v801, %v847
        %849 = vmatmul.f32.gmra.mxu0 %v707
        %v850 = vpop.f32.mrf.mxu0
        %v851 = vadd.f32 %v801, %v850
        %852 = vmatmul.f32.gmra.mxu0 %v722
        %v853 = vpop.f32.mrf.mxu0
        %v854 = vadd.f32 %v801, %v853
        %855 = vmatmul.f32.gmra.mxu0 %v737
        %v856 = vpop.f32.mrf.mxu0
        %v857 = vadd.f32 %v801, %v856
        %858 = vmatmul.f32.gmra.mxu0 %v752
        %v859 = vpop.f32.mrf.mxu0
        %v860 = vadd.f32 %v801, %v859
        %861 = vmatmul.f32.gmra.mxu0 %v767
        %v862 = vpop.f32.mrf.mxu0
        %v863 = vadd.f32 %v801, %v862
        %864 = vmatmul.f32.gmra.mxu0 %v782
        %v865 = vpop.f32.mrf.mxu0
        %v866 = vadd.f32 %v801, %v865
        %867 = vdwg.mxu0
        %v868 = vld [vmem:[#allocation12] sm:$0xff]
        %v869 = vld [vmem:[#allocation12 + $0x8] sm:$0xff]
        %v870 = vld [vmem:[#allocation12 + $0x10] sm:$0xff]
        %v871 = vld [vmem:[#allocation12 + $0x18] sm:$0xff]
        %v872 = vld [vmem:[#allocation12 + $0x20] sm:$0xff]
        %v873 = vld [vmem:[#allocation12 + $0x28] sm:$0xff]
        %v874 = vld [vmem:[#allocation12 + $0x30] sm:$0xff]
        %v875 = vld [vmem:[#allocation12 + $0x38] sm:$0xff]
        %v876 = vld [vmem:[#allocation12 + $0x40] sm:$0xff]
        %v877 = vld [vmem:[#allocation12 + $0x48] sm:$0xff]
        %v878 = vld [vmem:[#allocation12 + $0x50] sm:$0xff]
        %v879 = vld [vmem:[#allocation12 + $0x58] sm:$0xff]
        %v880 = vld [vmem:[#allocation12 + $0x60] sm:$0xff]
        %v881 = vld [vmem:[#allocation12 + $0x68] sm:$0xff]
        %v882 = vld [vmem:[#allocation12 + $0x70] sm:$0xff]
        %v883 = vld [vmem:[#allocation12 + $0x78] sm:$0xff]
        %v884 = vld [vmem:[%s7] sm:$0x1]
        %v886 = vperm.slane %v884, 0
        %888 = vmatpush.msra.mxu0 %v883
        %889 = vmatpush.msra.mxu0 %v882
        %890 = vmatpush.msra.mxu0 %v881
        %891 = vmatpush.msra.mxu0 %v880
        %892 = vmatpush.msra.mxu0 %v879
        %893 = vmatpush.msra.mxu0 %v878
        %894 = vmatpush.msra.mxu0 %v877
        %895 = vmatpush.msra.mxu0 %v876
        %896 = vmatpush.msra.mxu0 %v875
        %897 = vmatpush.msra.mxu0 %v874
        %898 = vmatpush.msra.mxu0 %v873
        %899 = vmatpush.msra.mxu0 %v872
        %900 = vmatpush.msra.mxu0 %v871
        %901 = vmatpush.msra.mxu0 %v870
        %902 = vmatpush.msra.mxu0 %v869
        %903 = vmatpush.msra.mxu0 %v868
        %904 = vmatmul.f32.gmra.mxu0 %v410
        %v905 = vpop.f32.mrf.mxu0
        %v906 = vadd.f32 %v886, %v905
        %907 = vmatmul.f32.gmra.mxu0 %v411
        %v908 = vpop.f32.mrf.mxu0
        %v909 = vadd.f32 %v886, %v908
        %910 = vmatmul.f32.gmra.mxu0 %v412
        %v911 = vpop.f32.mrf.mxu0
        %v912 = vadd.f32 %v886, %v911
        %913 = vmatmul.f32.gmra.mxu0 %v413
        %v914 = vpop.f32.mrf.mxu0
        %v915 = vadd.f32 %v886, %v914
        %916 = vmatmul.f32.gmra.mxu0 %v414
        %v917 = vpop.f32.mrf.mxu0
        %v918 = vadd.f32 %v886, %v917
        %919 = vmatmul.f32.gmra.mxu0 %v415
        %v920 = vpop.f32.mrf.mxu0
        %v921 = vadd.f32 %v886, %v920
        %922 = vmatmul.f32.gmra.mxu0 %v416
        %v923 = vpop.f32.mrf.mxu0
        %v924 = vadd.f32 %v886, %v923
        %925 = vmatmul.f32.gmra.mxu0 %v417
        %v926 = vpop.f32.mrf.mxu0
        %v927 = vadd.f32 %v886, %v926
        %928 = vmatmul.f32.gmra.mxu0 %v418
        %v929 = vpop.f32.mrf.mxu0
        %v930 = vadd.f32 %v886, %v929
        %931 = vmatmul.f32.gmra.mxu0 %v419
        %v932 = vpop.f32.mrf.mxu0
        %v933 = vadd.f32 %v886, %v932
        %934 = vmatmul.f32.gmra.mxu0 %v420
        %v935 = vpop.f32.mrf.mxu0
        %v936 = vadd.f32 %v886, %v935
        %937 = vmatmul.f32.gmra.mxu0 %v421
        %v938 = vpop.f32.mrf.mxu0
        %v939 = vadd.f32 %v886, %v938
        %940 = vmatmul.f32.gmra.mxu0 %v422
        %v941 = vpop.f32.mrf.mxu0
        %v942 = vadd.f32 %v886, %v941
        %943 = vmatmul.f32.gmra.mxu0 %v423
        %v944 = vpop.f32.mrf.mxu0
        %v945 = vadd.f32 %v886, %v944
        %946 = vmatmul.f32.gmra.mxu0 %v424
        %v947 = vpop.f32.mrf.mxu0
        %v948 = vadd.f32 %v886, %v947
        %949 = vmatmul.f32.gmra.mxu0 %v425
        %v950 = vpop.f32.mrf.mxu0
        %v951 = vadd.f32 %v886, %v950
        %952 = vdwg.mxu0
        %v953 = vand.u32 2147483647, %v906
        %v954 = vand.u32 2147483647, %v909
        %v955 = vand.u32 2147483647, %v912
        %v956 = vand.u32 2147483647, %v915
        %v957 = vand.u32 2147483647, %v918
        %v958 = vand.u32 2147483647, %v921
        %v959 = vand.u32 2147483647, %v924
        %v960 = vand.u32 2147483647, %v927
        %v961 = vand.u32 2147483647, %v930
        %v962 = vand.u32 2147483647, %v933
        %v963 = vand.u32 2147483647, %v936
        %v964 = vand.u32 2147483647, %v939
        %v965 = vand.u32 2147483647, %v942
        %v966 = vand.u32 2147483647, %v945
        %v967 = vand.u32 2147483647, %v948
        %v968 = vand.u32 2147483647, %v951
        %v969 = vadd.f32 %v953, 1.0
        %v970 = vadd.f32 %v954, 1.0
        %v971 = vadd.f32 %v955, 1.0
        %v972 = vadd.f32 %v956, 1.0
        %v973 = vadd.f32 %v957, 1.0
        %v974 = vadd.f32 %v958, 1.0
        %v975 = vadd.f32 %v959, 1.0
        %v976 = vadd.f32 %v960, 1.0
        %v977 = vadd.f32 %v961, 1.0
        %v978 = vadd.f32 %v962, 1.0
        %v979 = vadd.f32 %v963, 1.0
        %v980 = vadd.f32 %v964, 1.0
        %v981 = vadd.f32 %v965, 1.0
        %v982 = vadd.f32 %v966, 1.0
        %v983 = vadd.f32 %v967, 1.0
        %v984 = vadd.f32 %v968, 1.0
        %v985 = vrcp.pop %v969
        %v986 = vmul.f32 %v969, %v985
        %v987 = vsub.f32 1.0, %v986
        %v988 = vmul.f32 %v985, %v987
        %v989 = vadd.f32 %v985, %v988
        %vm990 = vweird.f32 %v969
        %vm991 = vweird.f32 %v985
        %vm992 = vmor %vm990, %vm991
        %v993 = vsel %vm992, %v985, %v989
        %v994 = vand.u32 2147483647, %v969
        %vm995 = vcmp.eq.f32.partialorder %v994, 8.507059e+37
        %v996 = vand.u32 %v969, 2147483648
        %v997 = vor.u32 1.1754944e-38, %v996
        %v998 = vsel %vm995, %v997, %v993
        %v999 = vmul.f32 %v906, %v998
        %v1000 = vrcp.pop %v970
        %v1001 = vmul.f32 %v970, %v1000
        %v1002 = vsub.f32 1.0, %v1001
        %v1003 = vmul.f32 %v1000, %v1002
        %v1004 = vadd.f32 %v1000, %v1003
        %vm1005 = vweird.f32 %v970
        %vm1006 = vweird.f32 %v1000
        %vm1007 = vmor %vm1005, %vm1006
        %v1008 = vsel %vm1007, %v1000, %v1004
        %v1009 = vand.u32 2147483647, %v970
        %vm1010 = vcmp.eq.f32.partialorder %v1009, 8.507059e+37
        %v1011 = vand.u32 %v970, 2147483648
        %v1012 = vor.u32 1.1754944e-38, %v1011
        %v1013 = vsel %vm1010, %v1012, %v1008
        %v1014 = vmul.f32 %v909, %v1013
        %v1015 = vrcp.pop %v971
        %v1016 = vmul.f32 %v971, %v1015
        %v1017 = vsub.f32 1.0, %v1016
        %v1018 = vmul.f32 %v1015, %v1017
        %v1019 = vadd.f32 %v1015, %v1018
        %vm1020 = vweird.f32 %v971
        %vm1021 = vweird.f32 %v1015
        %vm1022 = vmor %vm1020, %vm1021
        %v1023 = vsel %vm1022, %v1015, %v1019
        %v1024 = vand.u32 2147483647, %v971
        %vm1025 = vcmp.eq.f32.partialorder %v1024, 8.507059e+37
        %v1026 = vand.u32 %v971, 2147483648
        %v1027 = vor.u32 1.1754944e-38, %v1026
        %v1028 = vsel %vm1025, %v1027, %v1023
        %v1029 = vmul.f32 %v912, %v1028
        %v1030 = vrcp.pop %v972
        %v1031 = vmul.f32 %v972, %v1030
        %v1032 = vsub.f32 1.0, %v1031
        %v1033 = vmul.f32 %v1030, %v1032
        %v1034 = vadd.f32 %v1030, %v1033
        %vm1035 = vweird.f32 %v972
        %vm1036 = vweird.f32 %v1030
        %vm1037 = vmor %vm1035, %vm1036
        %v1038 = vsel %vm1037, %v1030, %v1034
        %v1039 = vand.u32 2147483647, %v972
        %vm1040 = vcmp.eq.f32.partialorder %v1039, 8.507059e+37
        %v1041 = vand.u32 %v972, 2147483648
        %v1042 = vor.u32 1.1754944e-38, %v1041
        %v1043 = vsel %vm1040, %v1042, %v1038
        %v1044 = vmul.f32 %v915, %v1043
        %v1045 = vrcp.pop %v973
        %v1046 = vmul.f32 %v973, %v1045
        %v1047 = vsub.f32 1.0, %v1046
        %v1048 = vmul.f32 %v1045, %v1047
        %v1049 = vadd.f32 %v1045, %v1048
        %vm1050 = vweird.f32 %v973
        %vm1051 = vweird.f32 %v1045
        %vm1052 = vmor %vm1050, %vm1051
        %v1053 = vsel %vm1052, %v1045, %v1049
        %v1054 = vand.u32 2147483647, %v973
        %vm1055 = vcmp.eq.f32.partialorder %v1054, 8.507059e+37
        %v1056 = vand.u32 %v973, 2147483648
        %v1057 = vor.u32 1.1754944e-38, %v1056
        %v1058 = vsel %vm1055, %v1057, %v1053
        %v1059 = vmul.f32 %v918, %v1058
        %v1060 = vrcp.pop %v974
        %v1061 = vmul.f32 %v974, %v1060
        %v1062 = vsub.f32 1.0, %v1061
        %v1063 = vmul.f32 %v1060, %v1062
        %v1064 = vadd.f32 %v1060, %v1063
        %vm1065 = vweird.f32 %v974
        %vm1066 = vweird.f32 %v1060
        %vm1067 = vmor %vm1065, %vm1066
        %v1068 = vsel %vm1067, %v1060, %v1064
        %v1069 = vand.u32 2147483647, %v974
        %vm1070 = vcmp.eq.f32.partialorder %v1069, 8.507059e+37
        %v1071 = vand.u32 %v974, 2147483648
        %v1072 = vor.u32 1.1754944e-38, %v1071
        %v1073 = vsel %vm1070, %v1072, %v1068
        %v1074 = vmul.f32 %v921, %v1073
        %v1075 = vrcp.pop %v975
        %v1076 = vmul.f32 %v975, %v1075
        %v1077 = vsub.f32 1.0, %v1076
        %v1078 = vmul.f32 %v1075, %v1077
        %v1079 = vadd.f32 %v1075, %v1078
        %vm1080 = vweird.f32 %v975
        %vm1081 = vweird.f32 %v1075
        %vm1082 = vmor %vm1080, %vm1081
        %v1083 = vsel %vm1082, %v1075, %v1079
        %v1084 = vand.u32 2147483647, %v975
        %vm1085 = vcmp.eq.f32.partialorder %v1084, 8.507059e+37
        %v1086 = vand.u32 %v975, 2147483648
        %v1087 = vor.u32 1.1754944e-38, %v1086
        %v1088 = vsel %vm1085, %v1087, %v1083
        %v1089 = vmul.f32 %v924, %v1088
        %v1090 = vrcp.pop %v976
        %v1091 = vmul.f32 %v976, %v1090
        %v1092 = vsub.f32 1.0, %v1091
        %v1093 = vmul.f32 %v1090, %v1092
        %v1094 = vadd.f32 %v1090, %v1093
        %vm1095 = vweird.f32 %v976
        %vm1096 = vweird.f32 %v1090
        %vm1097 = vmor %vm1095, %vm1096
        %v1098 = vsel %vm1097, %v1090, %v1094
        %v1099 = vand.u32 2147483647, %v976
        %vm1100 = vcmp.eq.f32.partialorder %v1099, 8.507059e+37
        %v1101 = vand.u32 %v976, 2147483648
        %v1102 = vor.u32 1.1754944e-38, %v1101
        %v1103 = vsel %vm1100, %v1102, %v1098
        %v1104 = vmul.f32 %v927, %v1103
        %v1105 = vrcp.pop %v977
        %v1106 = vmul.f32 %v977, %v1105
        %v1107 = vsub.f32 1.0, %v1106
        %v1108 = vmul.f32 %v1105, %v1107
        %v1109 = vadd.f32 %v1105, %v1108
        %vm1110 = vweird.f32 %v977
        %vm1111 = vweird.f32 %v1105
        %vm1112 = vmor %vm1110, %vm1111
        %v1113 = vsel %vm1112, %v1105, %v1109
        %v1114 = vand.u32 2147483647, %v977
        %vm1115 = vcmp.eq.f32.partialorder %v1114, 8.507059e+37
        %v1116 = vand.u32 %v977, 2147483648
        %v1117 = vor.u32 1.1754944e-38, %v1116
        %v1118 = vsel %vm1115, %v1117, %v1113
        %v1119 = vmul.f32 %v930, %v1118
        %v1120 = vrcp.pop %v978
        %v1121 = vmul.f32 %v978, %v1120
        %v1122 = vsub.f32 1.0, %v1121
        %v1123 = vmul.f32 %v1120, %v1122
        %v1124 = vadd.f32 %v1120, %v1123
        %vm1125 = vweird.f32 %v978
        %vm1126 = vweird.f32 %v1120
        %vm1127 = vmor %vm1125, %vm1126
        %v1128 = vsel %vm1127, %v1120, %v1124
        %v1129 = vand.u32 2147483647, %v978
        %vm1130 = vcmp.eq.f32.partialorder %v1129, 8.507059e+37
        %v1131 = vand.u32 %v978, 2147483648
        %v1132 = vor.u32 1.1754944e-38, %v1131
        %v1133 = vsel %vm1130, %v1132, %v1128
        %v1134 = vmul.f32 %v933, %v1133
        %v1135 = vrcp.pop %v979
        %v1136 = vmul.f32 %v979, %v1135
        %v1137 = vsub.f32 1.0, %v1136
        %v1138 = vmul.f32 %v1135, %v1137
        %v1139 = vadd.f32 %v1135, %v1138
        %vm1140 = vweird.f32 %v979
        %vm1141 = vweird.f32 %v1135
        %vm1142 = vmor %vm1140, %vm1141
        %v1143 = vsel %vm1142, %v1135, %v1139
        %v1144 = vand.u32 2147483647, %v979
        %vm1145 = vcmp.eq.f32.partialorder %v1144, 8.507059e+37
        %v1146 = vand.u32 %v979, 2147483648
        %v1147 = vor.u32 1.1754944e-38, %v1146
        %v1148 = vsel %vm1145, %v1147, %v1143
        %v1149 = vmul.f32 %v936, %v1148
        %v1150 = vrcp.pop %v980
        %v1151 = vmul.f32 %v980, %v1150
        %v1152 = vsub.f32 1.0, %v1151
        %v1153 = vmul.f32 %v1150, %v1152
        %v1154 = vadd.f32 %v1150, %v1153
        %vm1155 = vweird.f32 %v980
        %vm1156 = vweird.f32 %v1150
        %vm1157 = vmor %vm1155, %vm1156
        %v1158 = vsel %vm1157, %v1150, %v1154
        %v1159 = vand.u32 2147483647, %v980
        %vm1160 = vcmp.eq.f32.partialorder %v1159, 8.507059e+37
        %v1161 = vand.u32 %v980, 2147483648
        %v1162 = vor.u32 1.1754944e-38, %v1161
        %v1163 = vsel %vm1160, %v1162, %v1158
        %v1164 = vmul.f32 %v939, %v1163
        %v1165 = vrcp.pop %v981
        %v1166 = vmul.f32 %v981, %v1165
        %v1167 = vsub.f32 1.0, %v1166
        %v1168 = vmul.f32 %v1165, %v1167
        %v1169 = vadd.f32 %v1165, %v1168
        %vm1170 = vweird.f32 %v981
        %vm1171 = vweird.f32 %v1165
        %vm1172 = vmor %vm1170, %vm1171
        %v1173 = vsel %vm1172, %v1165, %v1169
        %v1174 = vand.u32 2147483647, %v981
        %vm1175 = vcmp.eq.f32.partialorder %v1174, 8.507059e+37
        %v1176 = vand.u32 %v981, 2147483648
        %v1177 = vor.u32 1.1754944e-38, %v1176
        %v1178 = vsel %vm1175, %v1177, %v1173
        %v1179 = vmul.f32 %v942, %v1178
        %v1180 = vrcp.pop %v982
        %v1181 = vmul.f32 %v982, %v1180
        %v1182 = vsub.f32 1.0, %v1181
        %v1183 = vmul.f32 %v1180, %v1182
        %v1184 = vadd.f32 %v1180, %v1183
        %vm1185 = vweird.f32 %v982
        %vm1186 = vweird.f32 %v1180
        %vm1187 = vmor %vm1185, %vm1186
        %v1188 = vsel %vm1187, %v1180, %v1184
        %v1189 = vand.u32 2147483647, %v982
        %vm1190 = vcmp.eq.f32.partialorder %v1189, 8.507059e+37
        %v1191 = vand.u32 %v982, 2147483648
        %v1192 = vor.u32 1.1754944e-38, %v1191
        %v1193 = vsel %vm1190, %v1192, %v1188
        %v1194 = vmul.f32 %v945, %v1193
        %v1195 = vrcp.pop %v983
        %v1196 = vmul.f32 %v983, %v1195
        %v1197 = vsub.f32 1.0, %v1196
        %v1198 = vmul.f32 %v1195, %v1197
        %v1199 = vadd.f32 %v1195, %v1198
        %vm1200 = vweird.f32 %v983
        %vm1201 = vweird.f32 %v1195
        %vm1202 = vmor %vm1200, %vm1201
        %v1203 = vsel %vm1202, %v1195, %v1199
        %v1204 = vand.u32 2147483647, %v983
        %vm1205 = vcmp.eq.f32.partialorder %v1204, 8.507059e+37
        %v1206 = vand.u32 %v983, 2147483648
        %v1207 = vor.u32 1.1754944e-38, %v1206
        %v1208 = vsel %vm1205, %v1207, %v1203
        %v1209 = vmul.f32 %v948, %v1208
        %v1210 = vrcp.pop %v984
        %v1211 = vmul.f32 %v984, %v1210
        %v1212 = vsub.f32 1.0, %v1211
        %v1213 = vmul.f32 %v1210, %v1212
        %v1214 = vadd.f32 %v1210, %v1213
        %vm1215 = vweird.f32 %v984
        %vm1216 = vweird.f32 %v1210
        %vm1217 = vmor %vm1215, %vm1216
        %v1218 = vsel %vm1217, %v1210, %v1214
        %v1219 = vand.u32 2147483647, %v984
        %vm1220 = vcmp.eq.f32.partialorder %v1219, 8.507059e+37
        %v1221 = vand.u32 %v984, 2147483648
        %v1222 = vor.u32 1.1754944e-38, %v1221
        %v1223 = vsel %vm1220, %v1222, %v1218
        %v1224 = vmul.f32 %v951, %v1223
        %v1225 = vlaneseq
        %v1226 = vshrl.u32 %v1225, 7
        %v1227 = vadd.s32 %v1226, 8
        %v1228 = vadd.s32 %v1226, 16
        %v1229 = vadd.s32 %v1226, 24
        %v1230 = vadd.s32 %v1226, 32
        %v1231 = vadd.s32 %v1226, 40
        %v1232 = vadd.s32 %v1226, 48
        %v1233 = vadd.s32 %v1226, 56
        %v1234 = vadd.s32 %v1226, 64
        %v1235 = vadd.s32 %v1226, 72
        %v1236 = vadd.s32 %v1226, 80
        %v1237 = vadd.s32 %v1226, 88
        %v1238 = vadd.s32 %v1226, 96
        %v1239 = vadd.s32 %v1226, 104
        %v1240 = vadd.s32 %v1226, 112
        %v1241 = vadd.s32 %v1226, 120
        %s1242 = smul.u32 %s27, 128
        %v1243 = vstv %s1242
        %v1244 = vadd.s32 %v1226, %v1243
        %v1245 = vadd.s32 %v1227, %v1243
        %v1246 = vadd.s32 %v1228, %v1243
        %v1247 = vadd.s32 %v1229, %v1243
        %v1248 = vadd.s32 %v1230, %v1243
        %v1249 = vadd.s32 %v1231, %v1243
        %v1250 = vadd.s32 %v1232, %v1243
        %v1251 = vadd.s32 %v1233, %v1243
        %v1252 = vadd.s32 %v1234, %v1243
        %v1253 = vadd.s32 %v1235, %v1243
        %v1254 = vadd.s32 %v1236, %v1243
        %v1255 = vadd.s32 %v1237, %v1243
        %v1256 = vadd.s32 %v1238, %v1243
        %v1257 = vadd.s32 %v1239, %v1243
        %v1258 = vadd.s32 %v1240, %v1243
        %v1259 = vadd.s32 %v1241, %v1243
        %vm1260 = vcmp.lt.s32.totalorder %v1244, 250
        %vm1261 = vcmp.lt.s32.totalorder %v1245, 250
        %vm1262 = vcmp.lt.s32.totalorder %v1246, 250
        %vm1263 = vcmp.lt.s32.totalorder %v1247, 250
        %vm1264 = vcmp.lt.s32.totalorder %v1248, 250
        %vm1265 = vcmp.lt.s32.totalorder %v1249, 250
        %vm1266 = vcmp.lt.s32.totalorder %v1250, 250
        %vm1267 = vcmp.lt.s32.totalorder %v1251, 250
        %vm1268 = vcmp.lt.s32.totalorder %v1252, 250
        %vm1269 = vcmp.lt.s32.totalorder %v1253, 250
        %vm1270 = vcmp.lt.s32.totalorder %v1254, 250
        %vm1271 = vcmp.lt.s32.totalorder %v1255, 250
        %vm1272 = vcmp.lt.s32.totalorder %v1256, 250
        %vm1273 = vcmp.lt.s32.totalorder %v1257, 250
        %vm1274 = vcmp.lt.s32.totalorder %v1258, 250
        %vm1275 = vcmp.lt.s32.totalorder %v1259, 250
        %v1276 = vsel %vm1260, %v821, -1e+30
        %v1277 = vsel %vm1261, %v824, -1e+30
        %v1278 = vsel %vm1262, %v827, -1e+30
        %v1279 = vsel %vm1263, %v830, -1e+30
        %v1280 = vsel %vm1264, %v833, -1e+30
        %v1281 = vsel %vm1265, %v836, -1e+30
        %v1282 = vsel %vm1266, %v839, -1e+30
        %v1283 = vsel %vm1267, %v842, -1e+30
        %v1284 = vsel %vm1268, %v845, -1e+30
        %v1285 = vsel %vm1269, %v848, -1e+30
        %v1286 = vsel %vm1270, %v851, -1e+30
        %v1287 = vsel %vm1271, %v854, -1e+30
        %v1288 = vsel %vm1272, %v857, -1e+30
        %v1289 = vsel %vm1273, %v860, -1e+30
        %v1290 = vsel %vm1274, %v863, -1e+30
        %v1291 = vsel %vm1275, %v866, -1e+30
        %v1292 = vld [vmem:[#allocation2] sm:$0x1]
        %v1293 = vmax.f32 %v1276, %v1280
        %v1294 = vmax.f32 %v1277, %v1281
        %v1295 = vmax.f32 %v1278, %v1282
        %v1296 = vmax.f32 %v1279, %v1283
        %v1297 = vmax.f32 %v1293, %v1284
        %v1298 = vmax.f32 %v1294, %v1285
        %v1299 = vmax.f32 %v1295, %v1286
        %v1300 = vmax.f32 %v1296, %v1287
        %v1301 = vmax.f32 %v1297, %v1288
        %v1302 = vmax.f32 %v1298, %v1289
        %v1303 = vmax.f32 %v1299, %v1290
        %v1304 = vmax.f32 %v1300, %v1291
        %v1305 = vmax.f32 %v1301, %v1302
        %v1306 = vmax.f32 %v1303, %v1304
        %v1307 = vmax.f32 %v1305, %v1306
        %v1308 = vrot.slane %v1307, 4
        %v1309 = vmax.f32 %v1307, %v1308
        %v1310 = vrot.slane %v1309, 2
        %v1311 = vmax.f32 %v1309, %v1310
        %v1312 = vrot.slane %v1311, 1
        %v1313 = vmax.f32 %v1311, %v1312
        %v1314 = vmax.f32 %v1292, %v1313
        %v1315 = vsub.f32 %v1292, %v1314
        %v1316 = vmul.f32 %v1315, 1.442695
        %v1317 = vpow.pop %v1316
        %v1319 = vperm.slane %v1314, 0
        %v1321 = vsub.f32 %v1276, %v1319
        %v1322 = vsub.f32 %v1277, %v1319
        %v1323 = vsub.f32 %v1278, %v1319
        %v1324 = vsub.f32 %v1279, %v1319
        %v1325 = vsub.f32 %v1280, %v1319
        %v1326 = vsub.f32 %v1281, %v1319
        %v1327 = vsub.f32 %v1282, %v1319
        %v1328 = vsub.f32 %v1283, %v1319
        %v1329 = vsub.f32 %v1284, %v1319
        %v1330 = vsub.f32 %v1285, %v1319
        %v1331 = vsub.f32 %v1286, %v1319
        %v1332 = vsub.f32 %v1287, %v1319
        %v1333 = vsub.f32 %v1288, %v1319
        %v1334 = vsub.f32 %v1289, %v1319
        %v1335 = vsub.f32 %v1290, %v1319
        %v1336 = vsub.f32 %v1291, %v1319
        %v1337 = vmul.f32 %v1321, 1.442695
        %v1338 = vpow.pop %v1337
        %v1339 = vmul.f32 %v1322, 1.442695
        %v1340 = vpow.pop %v1339
        %v1341 = vmul.f32 %v1323, 1.442695
        %v1342 = vpow.pop %v1341
        %v1343 = vmul.f32 %v1324, 1.442695
        %v1344 = vpow.pop %v1343
        %v1345 = vmul.f32 %v1325, 1.442695
        %v1346 = vpow.pop %v1345
        %v1347 = vmul.f32 %v1326, 1.442695
        %v1348 = vpow.pop %v1347
        %v1349 = vmul.f32 %v1327, 1.442695
        %v1350 = vpow.pop %v1349
        %v1351 = vmul.f32 %v1328, 1.442695
        %v1352 = vpow.pop %v1351
        %v1353 = vmul.f32 %v1329, 1.442695
        %v1354 = vpow.pop %v1353
        %v1355 = vmul.f32 %v1330, 1.442695
        %v1356 = vpow.pop %v1355
        %v1357 = vmul.f32 %v1331, 1.442695
        %v1358 = vpow.pop %v1357
        %v1359 = vmul.f32 %v1332, 1.442695
        %v1360 = vpow.pop %v1359
        %v1361 = vmul.f32 %v1333, 1.442695
        %v1362 = vpow.pop %v1361
        %v1363 = vmul.f32 %v1334, 1.442695
        %v1364 = vpow.pop %v1363
        %v1365 = vmul.f32 %v1335, 1.442695
        %v1366 = vpow.pop %v1365
        %v1367 = vmul.f32 %v1336, 1.442695
        %v1368 = vpow.pop %v1367
        %v1369 = vld [vmem:[%s353] sm:$0xf]
        %v1370 = vld [vmem:[#allocation3] sm:$0xff]
        %v1372 = vperm.slane %v1317, 0
        %v1374 = vmul.f32 %v1372, %v1370
        %v1375 = vpack.c.bf16 %v1340, %v1338
        %v1376 = vpack.c.bf16 %v1344, %v1342
        %v1377 = vpack.c.bf16 %v1348, %v1346
        %v1378 = vpack.c.bf16 %v1352, %v1350
        %v1379 = vpack.c.bf16 %v1356, %v1354
        %v1380 = vpack.c.bf16 %v1360, %v1358
        %v1381 = vpack.c.bf16 %v1364, %v1362
        %v1382 = vpack.c.bf16 %v1368, %v1366
        %1383 = vmatpush.bf16.msra.mxu0 %v1382
        %1384 = vmatpush.bf16.msra.mxu0 %v1381
        %1385 = vmatpush.bf16.msra.mxu0 %v1380
        %1386 = vmatpush.bf16.msra.mxu0 %v1379
        %1387 = vmatpush.bf16.msra.mxu0 %v1378
        %1388 = vmatpush.bf16.msra.mxu0 %v1377
        %1389 = vmatpush.bf16.msra.mxu0 %v1376
        %1390 = vmatpush.bf16.msra.mxu0 %v1375
        %1391 = vmatmul.bf16.gmra.mxu0 %v1369
        %v1392 = vpop.f32.mrf.mxu0
        %v1393 = vadd.f32 0.0, %v1392
        %v1394 = vpop.f32.mrf.mxu0
        %1395 = vdwg.mxu0
        %v1396 = vadd.f32 %v1374, %v1393
        %1397 = vst [vmem:[#allocation3] sm:$0xff] %v1396
        %v1398 = vld [vmem:[#allocation13] sm:$0xff]
        %v1399 = vmul.f32 %v1372, %v1398
        %v1400 = vmul.f32 %v1338, %v999
        %v1401 = vmul.f32 %v1340, %v1014
        %v1402 = vmul.f32 %v1342, %v1029
        %v1403 = vmul.f32 %v1344, %v1044
        %v1404 = vmul.f32 %v1346, %v1059
        %v1405 = vmul.f32 %v1348, %v1074
        %v1406 = vmul.f32 %v1350, %v1089
        %v1407 = vmul.f32 %v1352, %v1104
        %v1408 = vmul.f32 %v1354, %v1119
        %v1409 = vmul.f32 %v1356, %v1134
        %v1410 = vmul.f32 %v1358, %v1149
        %v1411 = vmul.f32 %v1360, %v1164
        %v1412 = vmul.f32 %v1362, %v1179
        %v1413 = vmul.f32 %v1364, %v1194
        %v1414 = vmul.f32 %v1366, %v1209
        %v1415 = vmul.f32 %v1368, %v1224
        %v1416 = vpack.c.bf16 %v1401, %v1400
        %v1417 = vpack.c.bf16 %v1403, %v1402
        %v1418 = vpack.c.bf16 %v1405, %v1404
        %v1419 = vpack.c.bf16 %v1407, %v1406
        %v1420 = vpack.c.bf16 %v1409, %v1408
        %v1421 = vpack.c.bf16 %v1411, %v1410
        %v1422 = vpack.c.bf16 %v1413, %v1412
        %v1423 = vpack.c.bf16 %v1415, %v1414
        %1424 = vmatpush.bf16.msra.mxu0 %v1423
        %1425 = vmatpush.bf16.msra.mxu0 %v1422
        %1426 = vmatpush.bf16.msra.mxu0 %v1421
        %1427 = vmatpush.bf16.msra.mxu0 %v1420
        %1428 = vmatpush.bf16.msra.mxu0 %v1419
        %1429 = vmatpush.bf16.msra.mxu0 %v1418
        %1430 = vmatpush.bf16.msra.mxu0 %v1417
        %1431 = vmatpush.bf16.msra.mxu0 %v1416
        %1432 = vmatmul.bf16.gmra.mxu0 %v1369
        %v1433 = vpop.f32.mrf.mxu0
        %v1434 = vadd.f32 0.0, %v1433
        %v1435 = vpop.f32.mrf.mxu0
        %1436 = vdwg.mxu0
        %v1437 = vadd.f32 %v1399, %v1434
        %1438 = vst [vmem:[#allocation13] sm:$0xff] %v1437
        %1439 = vst [vmem:[#allocation2] sm:$0x1] %v1314
        %p1440 = scmp.eq.s32.totalorder %s27, 1
        // Predicated region
        $region77: #{tpu_custom_call.1} parent=51 // pred_check
          %p1441 = pneg %p1440
        $region78: #{tpu_custom_call.1} parent=51 // pred_check_branch
          %1443 = sbr.rel (%p1441) target = $region80
        $region79: #{tpu_custom_call.1} parent=51 // pred_region
          %v1444 = vld [vmem:[#allocation3] sm:$0xff]
          %vm1445 = vcmp.gt.f32.partialorder %v1444, 0.0
          %v1446 = vsel %vm1445, %v1444, 1.0
          %v1447 = vld [vmem:[#allocation13] sm:$0xff]
          %v1448 = vrcp.pop %v1446
          %v1449 = vmul.f32 %v1447, %v1448
          %1450 = vst [vmem:[#allocation13] sm:$0xff] %v1449
        $region80: #{tpu_custom_call.1} parent=51 // pred_fallthru
          _
        // Predicated region
        $region81: #{tpu_custom_call.1} parent=51 // pred_check
          %p1451 = pneg %p218
        $region82: #{tpu_custom_call.1} parent=51 // pred_check_branch
          %1453 = sbr.rel (%p1451) target = $region84
        $region83: #{tpu_custom_call.1} parent=51 // pred_region
          %1455 = vsyncadd [#allocation6], 0
          %s1457 = sshll.u32 [#allocation13], 4
          %s1458 = int_to_ptr.vmem [resolvable:$true] %s1457
          %s1459 = sshll.u32 %s8, 4
          %s1460 = int_to_ptr.hbm [resolvable:$true] %s1459
          %1462 = dma.vmem_to_hbm [thread:$0]  %s1458, 128, %s1460, [#allocation6]
        $region84: #{tpu_custom_call.1} parent=51 // pred_fallthru
          _
        // Predicated region
        $region85: #{tpu_custom_call.1} parent=51 // pred_check
          %p1463 = pneg %p218
        $region86: #{tpu_custom_call.1} parent=51 // pred_check_branch
          %1465 = sbr.rel (%p1463) target = $region88
        $region87: #{tpu_custom_call.1} parent=51 // pred_region
          %1467 = dma.done [#allocation6], 128
        $region88: #{tpu_custom_call.1} parent=51 // pred_fallthru
          _
      $region52: #{tpu_custom_call.1} parent=5 // pred_fallthru
        _
      %p1468 = scmp.le.s32.totalorder 2, %s22
      // Predicated region
      $region89: #{tpu_custom_call.1} parent=5 // pred_check
        %p1469 = pneg %p1468
      $region90: #{tpu_custom_call.1} parent=5 // pred_check_branch
        %1471 = sbr.rel (%p1469) target = $region92
      $region91: #{tpu_custom_call.1} parent=5 // pred_region
        %s1472 = ssub.s32 %s22, 2
      $region92: #{tpu_custom_call.1} parent=5 // pred_fallthru
        _
    $region6: #{tpu_custom_call.1} parent=1 // loop_footer
      %s26 = sadd.s32 1, %s22
    $region7: #{tpu_custom_call.1} parent=1 // loop_footer_branch
      %21 = sbr.rel target = $region3
    $region8: #{tpu_custom_call.1} parent=1 // loop_exit
      _
    %1473 = vsyncpa [#allocation5], 1
    %s1474 = scalar_lea.sflag [#allocation5], 1
    %1475 = vsyncpa %s1474, 1
    %1476 = vsyncpa [#allocation8], 1
    %s1477 = scalar_lea.sflag [#allocation8], 1
    %1478 = vsyncpa %s1477, 1
    %1479 = vsyncpa [#allocation11], 1
    %1480 = vsyncpa [#allocation6], 1
    %s1481 = scalar_lea.sflag [#allocation6], 1
    %1482 = vsyncpa %s1481, 1

</llo_original>
